<compile_context>
chip_gen: v7x
topology: tpu7x:2x2x1
jax: 0.10.0
libtpu: 0.0.40
codegen_flags: <defaults>
</compile_context>

<pallas_src>
import functools

import jax
import jax.numpy as jnp
from jax.experimental import pallas as pl
from jax.experimental.pallas import tpu as pltpu

LANE = 128


def lstm_decoder_kernel(z_ref, wx_ref, wh_ref, b_ref, wheads_ref, bheads_ref,
                        out_ref, xproj_ref, *, T, B, HP):
    # --- input projection for all timesteps in one matmul, bias hoisted out of the loop ---
    # z_ref: (T*B, L), wx_ref: (L, 4*HP), b_ref: (1, 4*HP)  ->  xproj: (T*B, 4*HP)
    xproj_ref[...] = (jnp.dot(z_ref[...], wx_ref[...],
                              preferred_element_type=jnp.float32) + b_ref[...])

    wh = wh_ref[...]                     # (HP, 4*HP), resident for the whole recurrence

    h = jnp.zeros((B, HP), jnp.float32)  # lanes [H:HP) stay exactly zero
    c = jnp.zeros((B, HP), jnp.float32)

    # Fully static unrolled recurrence (T is small and known at trace time): every
    # slice below has a constant offset, so there is no dynamic addressing per step.
    for t in range(T):
        gates = (xproj_ref[t * B:(t + 1) * B, :]
                 + jnp.dot(h, wh, preferred_element_type=jnp.float32))   # (B, 4*HP)
        # lane-aligned full-width gate slices (PyTorch gate order i | f | g | o)
        i_g = jax.nn.sigmoid(gates[:, 0 * HP:1 * HP])
        f_g = jax.nn.sigmoid(gates[:, 1 * HP:2 * HP])
        g_g = jnp.tanh(gates[:, 2 * HP:3 * HP])
        o_g = jax.nn.sigmoid(gates[:, 3 * HP:4 * HP])
        c = f_g * c + i_g * g_g          # padded lanes: 0.5*0 + 0.5*0 = 0
        h = o_g * jnp.tanh(c)            # padded lanes stay 0

    # fused heads on the final hidden state -> one lane-dense (B, 128) store
    out_ref[...] = (jnp.dot(h, wheads_ref[...],
                            preferred_element_type=jnp.float32) + bheads_ref[...])


def lstm_decoder_forward(z, params):
    """z: [B, T, latent] float32. Returns (x_mean, x_log_var), each [B, 1, input_size]."""
    B, T, L = z.shape
    wx = params["wx"]          # (L, 4H)   = W_ih^T
    wh = params["wh"]          # (H, 4H)   = W_hh^T
    b = params["b"]            # (1, 4H)   = b_ih + b_hh
    wm = params["wm"]          # (H, I)    = W_mean^T
    bm = params["bm"]          # (1, I)
    wv = params["wv"]          # (H, I)    = W_logvar^T
    bv = params["bv"]          # (1, I)
    H = wh.shape[0]
    I = wm.shape[1]

    HP = ((H + LANE - 1) // LANE) * LANE                 # per-gate lane-padded width
    P = max(LANE, ((2 * I + LANE - 1) // LANE) * LANE)   # fused-head lane-dense width

    # pad the gate axis so each gate occupies its own lane-aligned HP-wide block
    def pad_gates(w):          # (rows, 4H) -> (rows, 4*HP)
        r = w.shape[0]
        return jnp.pad(w.reshape(r, 4, H),
                       ((0, 0), (0, 0), (0, HP - H))).reshape(r, 4 * HP)

    wx_p = pad_gates(wx)                                        # (L, 4*HP)
    wh_p = jnp.pad(pad_gates(wh), ((0, HP - H), (0, 0)))        # (HP, 4*HP)
    b_p = pad_gates(b)                                          # (1, 4*HP)

    # fuse the two heads into one lane-dense weight/bias; cols [0:I]=mean, [I:2I]=log_var
    w_heads = jnp.zeros((HP, P), jnp.float32)
    w_heads = w_heads.at[:H, :I].set(wm).at[:H, I:2 * I].set(wv)
    b_heads = jnp.zeros((1, P), jnp.float32)
    b_heads = b_heads.at[:, :I].set(bm).at[:, I:2 * I].set(bv)

    # time-major, flattened so the input projection is a single matmul inside the kernel
    z2d = jnp.transpose(z, (1, 0, 2)).reshape(T * B, L)

    kernel = functools.partial(lstm_decoder_kernel, T=T, B=B, HP=HP)

    out = pl.pallas_call(
        kernel,
        out_shape=jax.ShapeDtypeStruct((B, P), jnp.float32),
        grid_spec=pltpu.PrefetchScalarGridSpec(
            num_scalar_prefetch=0,
            grid=(1,),                                           # single invocation
            in_specs=[
                pl.BlockSpec((T * B, L), lambda i: (0, 0)),      # z (all timesteps)
                pl.BlockSpec((L, 4 * HP), lambda i: (0, 0)),     # wx (gate-padded)
                pl.BlockSpec((HP, 4 * HP), lambda i: (0, 0)),    # wh (gate-padded)
                pl.BlockSpec((1, 4 * HP), lambda i: (0, 0)),     # bias (gate-padded)
                pl.BlockSpec((HP, P), lambda i: (0, 0)),         # fused heads weight
                pl.BlockSpec((1, P), lambda i: (0, 0)),          # fused heads bias
            ],
            out_specs=pl.BlockSpec((B, P), lambda i: (0, 0)),    # lane-dense output slab
            scratch_shapes=[
                pltpu.VMEM((T * B, 4 * HP), jnp.float32),        # precomputed x-projection
            ],
        ),
        compiler_params=pltpu.CompilerParams(
            dimension_semantics=("arbitrary",)),
    )(z2d, wx_p, wh_p, b_p, w_heads, b_heads)

    # hidden.permute(1,0,2) gives [B, 1, H]; heads give [B, 1, I]
    x_mean = out[:, None, :I]
    x_log_var = out[:, None, I:2 * I]
    return x_mean, x_log_var


def reference_forward(z, params):
    """Pure-JAX reference identical to the PyTorch forward semantics."""
    B, T, L = z.shape
    H = params["wh"].shape[0]

    def step(carry, x_t):
        h, c = carry
        gates = x_t @ params["wx"] + h @ params["wh"] + params["b"][0]
        i = jax.nn.sigmoid(gates[:, 0 * H:1 * H])
        f = jax.nn.sigmoid(gates[:, 1 * H:2 * H])
        g = jnp.tanh(gates[:, 2 * H:3 * H])
        o = jax.nn.sigmoid(gates[:, 3 * H:4 * H])
        c = f * c + i * g
        h = o * jnp.tanh(c)
        return (h, c), None

    h0 = jnp.zeros((B, H), jnp.float32)
    (h, _), _ = jax.lax.scan(step, (h0, h0), jnp.transpose(z, (1, 0, 2)))
    x_mean = h @ params["wm"] + params["bm"][0]
    x_log_var = h @ params["wv"] + params["bv"][0]
    return x_mean[:, None, :], x_log_var[:, None, :]


def init_params(key, input_size, hidden_size, latent_size):
    ks = jax.random.split(key, 8)
    scale = 0.1
    return {
        # LSTM weights, stored transposed (in_features, 4H) with PyTorch gate order i|f|g|o
        "wx": scale * jax.random.normal(ks[0], (latent_size, 4 * hidden_size), jnp.float32),
        "wh": scale * jax.random.normal(ks[1], (hidden_size, 4 * hidden_size), jnp.float32),
        "b": scale * jax.random.normal(ks[2], (1, 4 * hidden_size), jnp.float32),
        # Linear heads, stored transposed (H, input_size)
        "wm": scale * jax.random.normal(ks[3], (hidden_size, input_size), jnp.float32),
        "bm": scale * jax.random.normal(ks[4], (1, input_size), jnp.float32),
        "wv": scale * jax.random.normal(ks[5], (hidden_size, input_size), jnp.float32),
        "bv": scale * jax.random.normal(ks[6], (1, input_size), jnp.float32),
    }


if __name__ == "__main__":
    B, T = 2, 8
    input_size, hidden_size, latent_size = 4, 32, 16

    key = jax.random.PRNGKey(0)
    k_z, k_p = jax.random.split(key)
    z = jax.random.normal(k_z, (B, T, latent_size), jnp.float32)
    params = init_params(k_p, input_size, hidden_size, latent_size)

    x_mean, x_log_var = lstm_decoder_forward(z, params)
    jax.block_until_ready((x_mean, x_log_var))

    ref_mean, ref_log_var = reference_forward(z, params)
    assert x_mean.shape == (B, 1, input_size)
    assert x_log_var.shape == (B, 1, input_size)
    assert jnp.allclose(x_mean, ref_mean, atol=1e-5, rtol=1e-5)
    assert jnp.allclose(x_log_var, ref_log_var, atol=1e-5, rtol=1e-5)

    print("KERNEL_OK")
</pallas_src>

<mosaic_0001>
module attributes {stable_mosaic.version = 11 : i64} {
  func.func @lstm_decoder_kernel(%arg0: i32, %arg1: memref<16x16xf32, #tpu.memory_space<vmem>>, %arg2: memref<16x512xf32, #tpu.memory_space<vmem>>, %arg3: memref<128x512xf32, #tpu.memory_space<vmem>>, %arg4: memref<1x512xf32, #tpu.memory_space<vmem>>, %arg5: memref<128x128xf32, #tpu.memory_space<vmem>>, %arg6: memref<1x128xf32, #tpu.memory_space<vmem>>, %arg7: memref<2x128xf32, #tpu.memory_space<vmem>>, %arg8: memref<16x512xf32, #tpu.memory_space<vmem>>) attributes {dimension_semantics = [#tpu.dimension_semantics<arbitrary>], iteration_bounds = array<i64: 1>, scalar_prefetch = 0 : i64, scratch_operands = 1 : i64, tpu.core_type = #tpu.core_type<tc>, window_params = [{pipeline_mode = #tpu.pipeline_mode<synchronous>, transform_indices = @transform_0, window_bounds = array<i64: 16, 16>}, {pipeline_mode = #tpu.pipeline_mode<synchronous>, transform_indices = @transform_1, window_bounds = array<i64: 16, 512>}, {pipeline_mode = #tpu.pipeline_mode<synchronous>, transform_indices = @transform_2, window_bounds = array<i64: 128, 512>}, {pipeline_mode = #tpu.pipeline_mode<synchronous>, transform_indices = @transform_3, window_bounds = array<i64: 1, 512>}, {pipeline_mode = #tpu.pipeline_mode<synchronous>, transform_indices = @transform_4, window_bounds = array<i64: 128, 128>}, {pipeline_mode = #tpu.pipeline_mode<synchronous>, transform_indices = @transform_5, window_bounds = array<i64: 1, 128>}, {pipeline_mode = #tpu.pipeline_mode<synchronous>, transform_indices = @transform_6, window_bounds = array<i64: 2, 128>}]} {
    %c0 = arith.constant 0 : index
    %c0_0 = arith.constant 0 : index
    %0 = vector.load %arg1[%c0, %c0_0] : memref<16x16xf32, #tpu.memory_space<vmem>>, vector<16x16xf32>
    %c0_1 = arith.constant 0 : index
    %c0_2 = arith.constant 0 : index
    %1 = vector.load %arg2[%c0_1, %c0_2] : memref<16x512xf32, #tpu.memory_space<vmem>>, vector<16x512xf32>
    %cst = arith.constant dense<0.000000e+00> : vector<16x512xf32>
    %2 = tpu.matmul %0, %1, %cst {dimension_numbers = #tpu.dot_dimension_numbers<[1], [0], [0], [1], [0, 0, 1, 1], [], []>} : vector<16x16xf32>, vector<16x512xf32>, vector<16x512xf32> -> vector<16x512xf32>
    %c0_3 = arith.constant 0 : index
    %c0_4 = arith.constant 0 : index
    %3 = vector.load %arg4[%c0_3, %c0_4] : memref<1x512xf32, #tpu.memory_space<vmem>>, vector<1x512xf32>
    %4 = vector.broadcast %3 : vector<1x512xf32> to vector<16x512xf32>
    %5 = arith.addf %2, %4 : vector<16x512xf32>
    %c0_5 = arith.constant 0 : index
    %c0_6 = arith.constant 0 : index
    %6 = vector.load %arg8[%c0_5, %c0_6] : memref<16x512xf32, #tpu.memory_space<vmem>>, vector<16x512xf32>
    tpu.vector_store %arg8[%c0_5, %c0_6], %5 {strides = array<i32>} : memref<16x512xf32, #tpu.memory_space<vmem>>, vector<16x512xf32>,
    %c0_7 = arith.constant 0 : index
    %c0_8 = arith.constant 0 : index
    %7 = vector.load %arg3[%c0_7, %c0_8] : memref<128x512xf32, #tpu.memory_space<vmem>>, vector<128x512xf32>
    %cst_9 = arith.constant 0.000000e+00 : f32
    %8 = vector.broadcast %cst_9 : f32 to vector<2x128xf32>
    %cst_10 = arith.constant 0.000000e+00 : f32
    %9 = vector.broadcast %cst_10 : f32 to vector<2x128xf32>
    %c0_11 = arith.constant 0 : index
    %c0_12 = arith.constant 0 : index
    %10 = vector.load %arg8[%c0_11, %c0_12] : memref<16x512xf32, #tpu.memory_space<vmem>>, vector<2x512xf32>
    %cst_13 = arith.constant dense<0.000000e+00> : vector<2x512xf32>
    %11 = tpu.matmul %8, %7, %cst_13 {dimension_numbers = #tpu.dot_dimension_numbers<[1], [0], [0], [1], [0, 0, 1, 1], [], []>} : vector<2x128xf32>, vector<128x512xf32>, vector<2x512xf32> -> vector<2x512xf32>
    %12 = arith.addf %10, %11 : vector<2x512xf32>
    %13 = vector.extract_strided_slice %12 {offsets = [0, 0], sizes = [2, 128], strides = [1, 1]} : vector<2x512xf32> to vector<2x128xf32>
    %14 = arith.negf %13 : vector<2x128xf32>
    %15 = math.exp %14 : vector<2x128xf32>
    %cst_14 = arith.constant 1.000000e+00 : f32
    %16 = vector.broadcast %cst_14 : f32 to vector<2x128xf32>
    %17 = arith.addf %16, %15 : vector<2x128xf32>
    %18 = arith.divf %16, %17 : vector<2x128xf32>
    %19 = vector.extract_strided_slice %12 {offsets = [0, 128], sizes = [2, 128], strides = [1, 1]} : vector<2x512xf32> to vector<2x128xf32>
    %20 = arith.negf %19 : vector<2x128xf32>
    %21 = math.exp %20 : vector<2x128xf32>
    %cst_15 = arith.constant 1.000000e+00 : f32
    %22 = vector.broadcast %cst_15 : f32 to vector<2x128xf32>
    %23 = arith.addf %22, %21 : vector<2x128xf32>
    %24 = arith.divf %22, %23 : vector<2x128xf32>
    %25 = vector.extract_strided_slice %12 {offsets = [0, 256], sizes = [2, 128], strides = [1, 1]} : vector<2x512xf32> to vector<2x128xf32>
    %26 = math.tanh %25 : vector<2x128xf32>
    %27 = vector.extract_strided_slice %12 {offsets = [0, 384], sizes = [2, 128], strides = [1, 1]} : vector<2x512xf32> to vector<2x128xf32>
    %28 = arith.negf %27 : vector<2x128xf32>
    %29 = math.exp %28 : vector<2x128xf32>
    %cst_16 = arith.constant 1.000000e+00 : f32
    %30 = vector.broadcast %cst_16 : f32 to vector<2x128xf32>
    %31 = arith.addf %30, %29 : vector<2x128xf32>
    %32 = arith.divf %30, %31 : vector<2x128xf32>
    %33 = arith.mulf %24, %9 : vector<2x128xf32>
    %34 = arith.mulf %18, %26 : vector<2x128xf32>
    %35 = arith.addf %33, %34 : vector<2x128xf32>
    %36 = math.tanh %35 : vector<2x128xf32>
    %37 = arith.mulf %32, %36 : vector<2x128xf32>
    %c2 = arith.constant 2 : index
    %c0_17 = arith.constant 0 : index
    %38 = vector.load %arg8[%c2, %c0_17] : memref<16x512xf32, #tpu.memory_space<vmem>>, vector<2x512xf32>
    %cst_18 = arith.constant dense<0.000000e+00> : vector<2x512xf32>
    %39 = tpu.matmul %37, %7, %cst_18 {dimension_numbers = #tpu.dot_dimension_numbers<[1], [0], [0], [1], [0, 0, 1, 1], [], []>} : vector<2x128xf32>, vector<128x512xf32>, vector<2x512xf32> -> vector<2x512xf32>
    %40 = arith.addf %38, %39 : vector<2x512xf32>
    %41 = vector.extract_strided_slice %40 {offsets = [0, 0], sizes = [2, 128], strides = [1, 1]} : vector<2x512xf32> to vector<2x128xf32>
    %42 = arith.negf %41 : vector<2x128xf32>
    %43 = math.exp %42 : vector<2x128xf32>
    %cst_19 = arith.constant 1.000000e+00 : f32
    %44 = vector.broadcast %cst_19 : f32 to vector<2x128xf32>
    %45 = arith.addf %44, %43 : vector<2x128xf32>
    %46 = arith.divf %44, %45 : vector<2x128xf32>
    %47 = vector.extract_strided_slice %40 {offsets = [0, 128], sizes = [2, 128], strides = [1, 1]} : vector<2x512xf32> to vector<2x128xf32>
    %48 = arith.negf %47 : vector<2x128xf32>
    %49 = math.exp %48 : vector<2x128xf32>
    %cst_20 = arith.constant 1.000000e+00 : f32
    %50 = vector.broadcast %cst_20 : f32 to vector<2x128xf32>
    %51 = arith.addf %50, %49 : vector<2x128xf32>
    %52 = arith.divf %50, %51 : vector<2x128xf32>
    %53 = vector.extract_strided_slice %40 {offsets = [0, 256], sizes = [2, 128], strides = [1, 1]} : vector<2x512xf32> to vector<2x128xf32>
    %54 = math.tanh %53 : vector<2x128xf32>
    %55 = vector.extract_strided_slice %40 {offsets = [0, 384], sizes = [2, 128], strides = [1, 1]} : vector<2x512xf32> to vector<2x128xf32>
    %56 = arith.negf %55 : vector<2x128xf32>
    %57 = math.exp %56 : vector<2x128xf32>
    %cst_21 = arith.constant 1.000000e+00 : f32
    %58 = vector.broadcast %cst_21 : f32 to vector<2x128xf32>
    %59 = arith.addf %58, %57 : vector<2x128xf32>
    %60 = arith.divf %58, %59 : vector<2x128xf32>
    %61 = arith.mulf %52, %35 : vector<2x128xf32>
    %62 = arith.mulf %46, %54 : vector<2x128xf32>
    %63 = arith.addf %61, %62 : vector<2x128xf32>
    %64 = math.tanh %63 : vector<2x128xf32>
    %65 = arith.mulf %60, %64 : vector<2x128xf32>
    %c4 = arith.constant 4 : index
    %c0_22 = arith.constant 0 : index
    %66 = vector.load %arg8[%c4, %c0_22] : memref<16x512xf32, #tpu.memory_space<vmem>>, vector<2x512xf32>
    %cst_23 = arith.constant dense<0.000000e+00> : vector<2x512xf32>
    %67 = tpu.matmul %65, %7, %cst_23 {dimension_numbers = #tpu.dot_dimension_numbers<[1], [0], [0], [1], [0, 0, 1, 1], [], []>} : vector<2x128xf32>, vector<128x512xf32>, vector<2x512xf32> -> vector<2x512xf32>
    %68 = arith.addf %66, %67 : vector<2x512xf32>
    %69 = vector.extract_strided_slice %68 {offsets = [0, 0], sizes = [2, 128], strides = [1, 1]} : vector<2x512xf32> to vector<2x128xf32>
    %70 = arith.negf %69 : vector<2x128xf32>
    %71 = math.exp %70 : vector<2x128xf32>
    %cst_24 = arith.constant 1.000000e+00 : f32
    %72 = vector.broadcast %cst_24 : f32 to vector<2x128xf32>
    %73 = arith.addf %72, %71 : vector<2x128xf32>
    %74 = arith.divf %72, %73 : vector<2x128xf32>
    %75 = vector.extract_strided_slice %68 {offsets = [0, 128], sizes = [2, 128], strides = [1, 1]} : vector<2x512xf32> to vector<2x128xf32>
    %76 = arith.negf %75 : vector<2x128xf32>
    %77 = math.exp %76 : vector<2x128xf32>
    %cst_25 = arith.constant 1.000000e+00 : f32
    %78 = vector.broadcast %cst_25 : f32 to vector<2x128xf32>
    %79 = arith.addf %78, %77 : vector<2x128xf32>
    %80 = arith.divf %78, %79 : vector<2x128xf32>
    %81 = vector.extract_strided_slice %68 {offsets = [0, 256], sizes = [2, 128], strides = [1, 1]} : vector<2x512xf32> to vector<2x128xf32>
    %82 = math.tanh %81 : vector<2x128xf32>
    %83 = vector.extract_strided_slice %68 {offsets = [0, 384], sizes = [2, 128], strides = [1, 1]} : vector<2x512xf32> to vector<2x128xf32>
    %84 = arith.negf %83 : vector<2x128xf32>
    %85 = math.exp %84 : vector<2x128xf32>
    %cst_26 = arith.constant 1.000000e+00 : f32
    %86 = vector.broadcast %cst_26 : f32 to vector<2x128xf32>
    %87 = arith.addf %86, %85 : vector<2x128xf32>
    %88 = arith.divf %86, %87 : vector<2x128xf32>
    %89 = arith.mulf %80, %63 : vector<2x128xf32>
    %90 = arith.mulf %74, %82 : vector<2x128xf32>
    %91 = arith.addf %89, %90 : vector<2x128xf32>
    %92 = math.tanh %91 : vector<2x128xf32>
    %93 = arith.mulf %88, %92 : vector<2x128xf32>
    %c6 = arith.constant 6 : index
    %c0_27 = arith.constant 0 : index
    %94 = vector.load %arg8[%c6, %c0_27] : memref<16x512xf32, #tpu.memory_space<vmem>>, vector<2x512xf32>
    %cst_28 = arith.constant dense<0.000000e+00> : vector<2x512xf32>
    %95 = tpu.matmul %93, %7, %cst_28 {dimension_numbers = #tpu.dot_dimension_numbers<[1], [0], [0], [1], [0, 0, 1, 1], [], []>} : vector<2x128xf32>, vector<128x512xf32>, vector<2x512xf32> -> vector<2x512xf32>
    %96 = arith.addf %94, %95 : vector<2x512xf32>
    %97 = vector.extract_strided_slice %96 {offsets = [0, 0], sizes = [2, 128], strides = [1, 1]} : vector<2x512xf32> to vector<2x128xf32>
    %98 = arith.negf %97 : vector<2x128xf32>
    %99 = math.exp %98 : vector<2x128xf32>
    %cst_29 = arith.constant 1.000000e+00 : f32
    %100 = vector.broadcast %cst_29 : f32 to vector<2x128xf32>
    %101 = arith.addf %100, %99 : vector<2x128xf32>
    %102 = arith.divf %100, %101 : vector<2x128xf32>
    %103 = vector.extract_strided_slice %96 {offsets = [0, 128], sizes = [2, 128], strides = [1, 1]} : vector<2x512xf32> to vector<2x128xf32>
    %104 = arith.negf %103 : vector<2x128xf32>
    %105 = math.exp %104 : vector<2x128xf32>
    %cst_30 = arith.constant 1.000000e+00 : f32
    %106 = vector.broadcast %cst_30 : f32 to vector<2x128xf32>
    %107 = arith.addf %106, %105 : vector<2x128xf32>
    %108 = arith.divf %106, %107 : vector<2x128xf32>
    %109 = vector.extract_strided_slice %96 {offsets = [0, 256], sizes = [2, 128], strides = [1, 1]} : vector<2x512xf32> to vector<2x128xf32>
    %110 = math.tanh %109 : vector<2x128xf32>
    %111 = vector.extract_strided_slice %96 {offsets = [0, 384], sizes = [2, 128], strides = [1, 1]} : vector<2x512xf32> to vector<2x128xf32>
    %112 = arith.negf %111 : vector<2x128xf32>
    %113 = math.exp %112 : vector<2x128xf32>
    %cst_31 = arith.constant 1.000000e+00 : f32
    %114 = vector.broadcast %cst_31 : f32 to vector<2x128xf32>
    %115 = arith.addf %114, %113 : vector<2x128xf32>
    %116 = arith.divf %114, %115 : vector<2x128xf32>
    %117 = arith.mulf %108, %91 : vector<2x128xf32>
    %118 = arith.mulf %102, %110 : vector<2x128xf32>
    %119 = arith.addf %117, %118 : vector<2x128xf32>
    %120 = math.tanh %119 : vector<2x128xf32>
    %121 = arith.mulf %116, %120 : vector<2x128xf32>
    %c8 = arith.constant 8 : index
    %c0_32 = arith.constant 0 : index
    %122 = vector.load %arg8[%c8, %c0_32] : memref<16x512xf32, #tpu.memory_space<vmem>>, vector<2x512xf32>
    %cst_33 = arith.constant dense<0.000000e+00> : vector<2x512xf32>
    %123 = tpu.matmul %121, %7, %cst_33 {dimension_numbers = #tpu.dot_dimension_numbers<[1], [0], [0], [1], [0, 0, 1, 1], [], []>} : vector<2x128xf32>, vector<128x512xf32>, vector<2x512xf32> -> vector<2x512xf32>
    %124 = arith.addf %122, %123 : vector<2x512xf32>
    %125 = vector.extract_strided_slice %124 {offsets = [0, 0], sizes = [2, 128], strides = [1, 1]} : vector<2x512xf32> to vector<2x128xf32>
    %126 = arith.negf %125 : vector<2x128xf32>
    %127 = math.exp %126 : vector<2x128xf32>
    %cst_34 = arith.constant 1.000000e+00 : f32
    %128 = vector.broadcast %cst_34 : f32 to vector<2x128xf32>
    %129 = arith.addf %128, %127 : vector<2x128xf32>
    %130 = arith.divf %128, %129 : vector<2x128xf32>
    %131 = vector.extract_strided_slice %124 {offsets = [0, 128], sizes = [2, 128], strides = [1, 1]} : vector<2x512xf32> to vector<2x128xf32>
    %132 = arith.negf %131 : vector<2x128xf32>
    %133 = math.exp %132 : vector<2x128xf32>
    %cst_35 = arith.constant 1.000000e+00 : f32
    %134 = vector.broadcast %cst_35 : f32 to vector<2x128xf32>
    %135 = arith.addf %134, %133 : vector<2x128xf32>
    %136 = arith.divf %134, %135 : vector<2x128xf32>
    %137 = vector.extract_strided_slice %124 {offsets = [0, 256], sizes = [2, 128], strides = [1, 1]} : vector<2x512xf32> to vector<2x128xf32>
    %138 = math.tanh %137 : vector<2x128xf32>
    %139 = vector.extract_strided_slice %124 {offsets = [0, 384], sizes = [2, 128], strides = [1, 1]} : vector<2x512xf32> to vector<2x128xf32>
    %140 = arith.negf %139 : vector<2x128xf32>
    %141 = math.exp %140 : vector<2x128xf32>
    %cst_36 = arith.constant 1.000000e+00 : f32
    %142 = vector.broadcast %cst_36 : f32 to vector<2x128xf32>
    %143 = arith.addf %142, %141 : vector<2x128xf32>
    %144 = arith.divf %142, %143 : vector<2x128xf32>
    %145 = arith.mulf %136, %119 : vector<2x128xf32>
    %146 = arith.mulf %130, %138 : vector<2x128xf32>
    %147 = arith.addf %145, %146 : vector<2x128xf32>
    %148 = math.tanh %147 : vector<2x128xf32>
    %149 = arith.mulf %144, %148 : vector<2x128xf32>
    %c10 = arith.constant 10 : index
    %c0_37 = arith.constant 0 : index
    %150 = vector.load %arg8[%c10, %c0_37] : memref<16x512xf32, #tpu.memory_space<vmem>>, vector<2x512xf32>
    %cst_38 = arith.constant dense<0.000000e+00> : vector<2x512xf32>
    %151 = tpu.matmul %149, %7, %cst_38 {dimension_numbers = #tpu.dot_dimension_numbers<[1], [0], [0], [1], [0, 0, 1, 1], [], []>} : vector<2x128xf32>, vector<128x512xf32>, vector<2x512xf32> -> vector<2x512xf32>
    %152 = arith.addf %150, %151 : vector<2x512xf32>
    %153 = vector.extract_strided_slice %152 {offsets = [0, 0], sizes = [2, 128], strides = [1, 1]} : vector<2x512xf32> to vector<2x128xf32>
    %154 = arith.negf %153 : vector<2x128xf32>
    %155 = math.exp %154 : vector<2x128xf32>
    %cst_39 = arith.constant 1.000000e+00 : f32
    %156 = vector.broadcast %cst_39 : f32 to vector<2x128xf32>
    %157 = arith.addf %156, %155 : vector<2x128xf32>
    %158 = arith.divf %156, %157 : vector<2x128xf32>
    %159 = vector.extract_strided_slice %152 {offsets = [0, 128], sizes = [2, 128], strides = [1, 1]} : vector<2x512xf32> to vector<2x128xf32>
    %160 = arith.negf %159 : vector<2x128xf32>
    %161 = math.exp %160 : vector<2x128xf32>
    %cst_40 = arith.constant 1.000000e+00 : f32
    %162 = vector.broadcast %cst_40 : f32 to vector<2x128xf32>
    %163 = arith.addf %162, %161 : vector<2x128xf32>
    %164 = arith.divf %162, %163 : vector<2x128xf32>
    %165 = vector.extract_strided_slice %152 {offsets = [0, 256], sizes = [2, 128], strides = [1, 1]} : vector<2x512xf32> to vector<2x128xf32>
    %166 = math.tanh %165 : vector<2x128xf32>
    %167 = vector.extract_strided_slice %152 {offsets = [0, 384], sizes = [2, 128], strides = [1, 1]} : vector<2x512xf32> to vector<2x128xf32>
    %168 = arith.negf %167 : vector<2x128xf32>
    %169 = math.exp %168 : vector<2x128xf32>
    %cst_41 = arith.constant 1.000000e+00 : f32
    %170 = vector.broadcast %cst_41 : f32 to vector<2x128xf32>
    %171 = arith.addf %170, %169 : vector<2x128xf32>
    %172 = arith.divf %170, %171 : vector<2x128xf32>
    %173 = arith.mulf %164, %147 : vector<2x128xf32>
    %174 = arith.mulf %158, %166 : vector<2x128xf32>
    %175 = arith.addf %173, %174 : vector<2x128xf32>
    %176 = math.tanh %175 : vector<2x128xf32>
    %177 = arith.mulf %172, %176 : vector<2x128xf32>
    %c12 = arith.constant 12 : index
    %c0_42 = arith.constant 0 : index
    %178 = vector.load %arg8[%c12, %c0_42] : memref<16x512xf32, #tpu.memory_space<vmem>>, vector<2x512xf32>
    %cst_43 = arith.constant dense<0.000000e+00> : vector<2x512xf32>
    %179 = tpu.matmul %177, %7, %cst_43 {dimension_numbers = #tpu.dot_dimension_numbers<[1], [0], [0], [1], [0, 0, 1, 1], [], []>} : vector<2x128xf32>, vector<128x512xf32>, vector<2x512xf32> -> vector<2x512xf32>
    %180 = arith.addf %178, %179 : vector<2x512xf32>
    %181 = vector.extract_strided_slice %180 {offsets = [0, 0], sizes = [2, 128], strides = [1, 1]} : vector<2x512xf32> to vector<2x128xf32>
    %182 = arith.negf %181 : vector<2x128xf32>
    %183 = math.exp %182 : vector<2x128xf32>
    %cst_44 = arith.constant 1.000000e+00 : f32
    %184 = vector.broadcast %cst_44 : f32 to vector<2x128xf32>
    %185 = arith.addf %184, %183 : vector<2x128xf32>
    %186 = arith.divf %184, %185 : vector<2x128xf32>
    %187 = vector.extract_strided_slice %180 {offsets = [0, 128], sizes = [2, 128], strides = [1, 1]} : vector<2x512xf32> to vector<2x128xf32>
    %188 = arith.negf %187 : vector<2x128xf32>
    %189 = math.exp %188 : vector<2x128xf32>
    %cst_45 = arith.constant 1.000000e+00 : f32
    %190 = vector.broadcast %cst_45 : f32 to vector<2x128xf32>
    %191 = arith.addf %190, %189 : vector<2x128xf32>
    %192 = arith.divf %190, %191 : vector<2x128xf32>
    %193 = vector.extract_strided_slice %180 {offsets = [0, 256], sizes = [2, 128], strides = [1, 1]} : vector<2x512xf32> to vector<2x128xf32>
    %194 = math.tanh %193 : vector<2x128xf32>
    %195 = vector.extract_strided_slice %180 {offsets = [0, 384], sizes = [2, 128], strides = [1, 1]} : vector<2x512xf32> to vector<2x128xf32>
    %196 = arith.negf %195 : vector<2x128xf32>
    %197 = math.exp %196 : vector<2x128xf32>
    %cst_46 = arith.constant 1.000000e+00 : f32
    %198 = vector.broadcast %cst_46 : f32 to vector<2x128xf32>
    %199 = arith.addf %198, %197 : vector<2x128xf32>
    %200 = arith.divf %198, %199 : vector<2x128xf32>
    %201 = arith.mulf %192, %175 : vector<2x128xf32>
    %202 = arith.mulf %186, %194 : vector<2x128xf32>
    %203 = arith.addf %201, %202 : vector<2x128xf32>
    %204 = math.tanh %203 : vector<2x128xf32>
    %205 = arith.mulf %200, %204 : vector<2x128xf32>
    %c14 = arith.constant 14 : index
    %c0_47 = arith.constant 0 : index
    %206 = vector.load %arg8[%c14, %c0_47] : memref<16x512xf32, #tpu.memory_space<vmem>>, vector<2x512xf32>
    %cst_48 = arith.constant dense<0.000000e+00> : vector<2x512xf32>
    %207 = tpu.matmul %205, %7, %cst_48 {dimension_numbers = #tpu.dot_dimension_numbers<[1], [0], [0], [1], [0, 0, 1, 1], [], []>} : vector<2x128xf32>, vector<128x512xf32>, vector<2x512xf32> -> vector<2x512xf32>
    %208 = arith.addf %206, %207 : vector<2x512xf32>
    %209 = vector.extract_strided_slice %208 {offsets = [0, 0], sizes = [2, 128], strides = [1, 1]} : vector<2x512xf32> to vector<2x128xf32>
    %210 = arith.negf %209 : vector<2x128xf32>
    %211 = math.exp %210 : vector<2x128xf32>
    %cst_49 = arith.constant 1.000000e+00 : f32
    %212 = vector.broadcast %cst_49 : f32 to vector<2x128xf32>
    %213 = arith.addf %212, %211 : vector<2x128xf32>
    %214 = arith.divf %212, %213 : vector<2x128xf32>
    %215 = vector.extract_strided_slice %208 {offsets = [0, 128], sizes = [2, 128], strides = [1, 1]} : vector<2x512xf32> to vector<2x128xf32>
    %216 = arith.negf %215 : vector<2x128xf32>
    %217 = math.exp %216 : vector<2x128xf32>
    %cst_50 = arith.constant 1.000000e+00 : f32
    %218 = vector.broadcast %cst_50 : f32 to vector<2x128xf32>
    %219 = arith.addf %218, %217 : vector<2x128xf32>
    %220 = arith.divf %218, %219 : vector<2x128xf32>
    %221 = vector.extract_strided_slice %208 {offsets = [0, 256], sizes = [2, 128], strides = [1, 1]} : vector<2x512xf32> to vector<2x128xf32>
    %222 = math.tanh %221 : vector<2x128xf32>
    %223 = vector.extract_strided_slice %208 {offsets = [0, 384], sizes = [2, 128], strides = [1, 1]} : vector<2x512xf32> to vector<2x128xf32>
    %224 = arith.negf %223 : vector<2x128xf32>
    %225 = math.exp %224 : vector<2x128xf32>
    %cst_51 = arith.constant 1.000000e+00 : f32
    %226 = vector.broadcast %cst_51 : f32 to vector<2x128xf32>
    %227 = arith.addf %226, %225 : vector<2x128xf32>
    %228 = arith.divf %226, %227 : vector<2x128xf32>
    %229 = arith.mulf %220, %203 : vector<2x128xf32>
    %230 = arith.mulf %214, %222 : vector<2x128xf32>
    %231 = arith.addf %229, %230 : vector<2x128xf32>
    %232 = math.tanh %231 : vector<2x128xf32>
    %233 = arith.mulf %228, %232 : vector<2x128xf32>
    %c0_52 = arith.constant 0 : index
    %c0_53 = arith.constant 0 : index
    %234 = vector.load %arg5[%c0_52, %c0_53] : memref<128x128xf32, #tpu.memory_space<vmem>>, vector<128x128xf32>
    %cst_54 = arith.constant dense<0.000000e+00> : vector<2x128xf32>
    %235 = tpu.matmul %233, %234, %cst_54 {dimension_numbers = #tpu.dot_dimension_numbers<[1], [0], [0], [1], [0, 0, 1, 1], [], []>} : vector<2x128xf32>, vector<128x128xf32>, vector<2x128xf32> -> vector<2x128xf32>
    %c0_55 = arith.constant 0 : index
    %c0_56 = arith.constant 0 : index
    %236 = vector.load %arg6[%c0_55, %c0_56] : memref<1x128xf32, #tpu.memory_space<vmem>>, vector<1x128xf32>
    %237 = vector.broadcast %236 : vector<1x128xf32> to vector<2x128xf32>
    %238 = arith.addf %235, %237 : vector<2x128xf32>
    %c0_57 = arith.constant 0 : index
    %c0_58 = arith.constant 0 : index
    %239 = vector.load %arg7[%c0_57, %c0_58] : memref<2x128xf32, #tpu.memory_space<vmem>>, vector<2x128xf32>
    tpu.vector_store %arg7[%c0_57, %c0_58], %238 {strides = array<i32>} : memref<2x128xf32, #tpu.memory_space<vmem>>, vector<2x128xf32>,
    return
  }
  func.func @transform_0(%arg0: i32) -> (i32, i32) {
    %c0_i32 = arith.constant 0 : i32
    %c0_i32_0 = arith.constant 0 : i32
    %c0_i32_1 = arith.constant 0 : i32
    return %c0_i32, %c0_i32_0 : i32, i32
  }
  func.func @transform_1(%arg0: i32) -> (i32, i32) {
    %c0_i32 = arith.constant 0 : i32
    %c0_i32_0 = arith.constant 0 : i32
    %c0_i32_1 = arith.constant 0 : i32
    return %c0_i32, %c0_i32_0 : i32, i32
  }
  func.func @transform_2(%arg0: i32) -> (i32, i32) {
    %c0_i32 = arith.constant 0 : i32
    %c0_i32_0 = arith.constant 0 : i32
    %c0_i32_1 = arith.constant 0 : i32
    return %c0_i32, %c0_i32_0 : i32, i32
  }
  func.func @transform_3(%arg0: i32) -> (i32, i32) {
    %c0_i32 = arith.constant 0 : i32
    %c0_i32_0 = arith.constant 0 : i32
    %c0_i32_1 = arith.constant 0 : i32
    return %c0_i32, %c0_i32_0 : i32, i32
  }
  func.func @transform_4(%arg0: i32) -> (i32, i32) {
    %c0_i32 = arith.constant 0 : i32
    %c0_i32_0 = arith.constant 0 : i32
    %c0_i32_1 = arith.constant 0 : i32
    return %c0_i32, %c0_i32_0 : i32, i32
  }
  func.func @transform_5(%arg0: i32) -> (i32, i32) {
    %c0_i32 = arith.constant 0 : i32
    %c0_i32_0 = arith.constant 0 : i32
    %c0_i32_1 = arith.constant 0 : i32
    return %c0_i32, %c0_i32_0 : i32, i32
  }
  func.func @transform_6(%arg0: i32) -> (i32, i32) {
    %c0_i32 = arith.constant 0 : i32
    %c0_i32_0 = arith.constant 0 : i32
    %c0_i32_1 = arith.constant 0 : i32
    return %c0_i32, %c0_i32_0 : i32, i32
  }
}

</mosaic_0001>

<llo_original>
// kernel: tpu_custom_call.1
$region0: #{tpu_custom_call.1}
  #allocation0 [shape = 'u32[]', space=smem, size = 0x4, offset = 0x4, fixed_abs, tag = 'smem constant byte address 0x4 - core index']
  #allocation1 [shape = 'u32[144,128]{1,0:T(1,128)}', space=vmem, size = 0x12000, scoped, tag = 'internal scratch']
  #allocation2 [shape = 'f32[16,512]{1,0:T(8,128)}', space=vmem, size = 0x8000, scoped, tag = 'scratch operand']
  %s0 = inlined_call_operand.hbm [shape: f32[16,16], index: 0, kind: input, shape index: {}]
  %s1 = inlined_call_operand.hbm [shape: f32[16,512], index: 1, kind: input, shape index: {}]
  %s2 = inlined_call_operand.hbm [shape: f32[128,512], index: 2, kind: input, shape index: {}]
  %s3 = inlined_call_operand.vmem [shape: f32[1,512], index: 3, kind: input, shape index: {}]
  %s4 = inlined_call_operand.hbm [shape: f32[128,128], index: 4, kind: input, shape index: {}]
  %s5 = inlined_call_operand.vmem [shape: f32[1,128], index: 5, kind: input, shape index: {}]
  %s6 = inlined_call_operand.hbm [shape: f32[2,128], index: 6, kind: output, shape index: {}]
  %s7 = sld [smem:[#allocation0]]
  $region50: #{tpu_custom_call.1} parent=0
    _
  %s9 = ssub.s32 1, %s7
  %s10 = scalar_select 0, %s9, %s7
  $region1: #{tpu_custom_call.1} parent=0
    #allocation3 [shape = 'u8[8192]{0}', space=vmem, size = 0x2000, scoped, tag = 'input window, operand 0, single buffered']
    #allocation4 [shape = 's32[1]{0}', space=sflag, size = 0x4, scoped, tag = 'scoped memory for tpu_custom_call.1']
    #allocation5 [shape = 's32[1]{0}', space=sflag, size = 0x4, scoped, tag = 'scoped memory for tpu_custom_call.1']
    #allocation6 [shape = 'u8[32768]{0}', space=vmem, size = 0x8000, scoped, tag = 'input window, operand 1, single buffered']
    #allocation7 [shape = 's32[1]{0}', space=sflag, size = 0x4, scoped, tag = 'scoped memory for tpu_custom_call.1']
    #allocation8 [shape = 'u8[262144]{0}', space=vmem, size = 0x40000, scoped, tag = 'input window, operand 2, single buffered']
    #allocation9 [shape = 'u8[65536]{0}', space=vmem, size = 0x10000, scoped, tag = 'input window, operand 4, single buffered']
    #allocation10 [shape = 's32[1]{0}', space=sflag, size = 0x4, scoped, tag = 'scoped memory for tpu_custom_call.1']
    #allocation11 [shape = 'u8[1024]{0}', space=vmem, size = 0x400, scoped, tag = 'output window, operand 0, single buffered']
    %11 = vsyncpa [#allocation4], 0
    %12 = vsyncpa [#allocation7], 0
    %13 = vsyncpa [#allocation10], 0
    %14 = vsyncpa [#allocation5], 0
    // Predicated region
    $region2: #{tpu_custom_call.1} parent=1 // pred_check
      _
    $region3: #{tpu_custom_call.1} parent=1 // pred_check_branch
      %16 = sbr.rel (0) target = $region5
    $region4: #{tpu_custom_call.1} parent=1 // pred_region
      %s18 = ssub.s32 256, 256
      %19 = vsyncadd [#allocation4], %s18
      %s20 = sshll.u32 [#allocation3], 4
      %s21 = int_to_ptr.vmem [resolvable:$true] %s20
      %26 = dma.hbm_to_vmem [thread:$0]  %s0, 256, %s21, [#allocation4], 128, 128, 8
    $region5: #{tpu_custom_call.1} parent=1 // pred_fallthru
      _
    // Predicated region
    $region6: #{tpu_custom_call.1} parent=1 // pred_check
      _
    $region7: #{tpu_custom_call.1} parent=1 // pred_check_branch
      %28 = sbr.rel (0) target = $region9
    $region8: #{tpu_custom_call.1} parent=1 // pred_region
      %s30 = ssub.s32 1024, 1024
      %31 = vsyncadd [#allocation7], %s30
      %s32 = sshll.u32 [#allocation6], 4
      %s33 = int_to_ptr.vmem [resolvable:$true] %s32
      %38 = dma.hbm_to_vmem [thread:$0]  %s1, 1024, %s33, [#allocation7], 512, 512, 32
    $region9: #{tpu_custom_call.1} parent=1 // pred_fallthru
      _
    // Predicated region
    $region10: #{tpu_custom_call.1} parent=1 // pred_check
      _
    $region11: #{tpu_custom_call.1} parent=1 // pred_check_branch
      %40 = sbr.rel (0) target = $region13
    $region12: #{tpu_custom_call.1} parent=1 // pred_region
      %s42 = ssub.s32 8192, 8192
      %43 = vsyncadd [#allocation7], %s42
      %s44 = sshll.u32 [#allocation8], 4
      %s45 = int_to_ptr.vmem [resolvable:$true] %s44
      %50 = dma.hbm_to_vmem [thread:$0]  %s2, 8192, %s45, [#allocation7], 512, 512, 32
    $region13: #{tpu_custom_call.1} parent=1 // pred_fallthru
      _
    // Predicated region
    $region14: #{tpu_custom_call.1} parent=1 // pred_check
      _
    $region15: #{tpu_custom_call.1} parent=1 // pred_check_branch
      %52 = sbr.rel (0) target = $region17
    $region16: #{tpu_custom_call.1} parent=1 // pred_region
      _
    $region17: #{tpu_custom_call.1} parent=1 // pred_fallthru
      _
    // Predicated region
    $region18: #{tpu_custom_call.1} parent=1 // pred_check
      _
    $region19: #{tpu_custom_call.1} parent=1 // pred_check_branch
      %54 = sbr.rel (0) target = $region21
    $region20: #{tpu_custom_call.1} parent=1 // pred_region
      %s56 = ssub.s32 2048, 2048
      %57 = vsyncadd [#allocation10], %s56
      %s58 = sshll.u32 [#allocation9], 4
      %s59 = int_to_ptr.vmem [resolvable:$true] %s58
      %64 = dma.hbm_to_vmem [thread:$0]  %s4, 2048, %s59, [#allocation10], 128, 128, 8
    $region21: #{tpu_custom_call.1} parent=1 // pred_fallthru
      _
    // Predicated region
    $region22: #{tpu_custom_call.1} parent=1 // pred_check
      _
    $region23: #{tpu_custom_call.1} parent=1 // pred_check_branch
      %66 = sbr.rel (0) target = $region25
    $region24: #{tpu_custom_call.1} parent=1 // pred_region
      _
    $region25: #{tpu_custom_call.1} parent=1 // pred_fallthru
      _
    // Predicated region
    $region26: #{tpu_custom_call.1} parent=1 // pred_check
      _
    $region27: #{tpu_custom_call.1} parent=1 // pred_check_branch
      %68 = sbr.rel (0) target = $region29
    $region28: #{tpu_custom_call.1} parent=1 // pred_region
      %69 = dma.done [#allocation4], 256
    $region29: #{tpu_custom_call.1} parent=1 // pred_fallthru
      _
    // Predicated region
    $region30: #{tpu_custom_call.1} parent=1 // pred_check
      _
    $region31: #{tpu_custom_call.1} parent=1 // pred_check_branch
      %71 = sbr.rel (0) target = $region33
    $region32: #{tpu_custom_call.1} parent=1 // pred_region
      %72 = dma.done [#allocation7], 1024
    $region33: #{tpu_custom_call.1} parent=1 // pred_fallthru
      _
    // Predicated region
    $region34: #{tpu_custom_call.1} parent=1 // pred_check
      _
    $region35: #{tpu_custom_call.1} parent=1 // pred_check_branch
      %74 = sbr.rel (0) target = $region37
    $region36: #{tpu_custom_call.1} parent=1 // pred_region
      %75 = dma.done [#allocation7], 8192
    $region37: #{tpu_custom_call.1} parent=1 // pred_fallthru
      _
    // Predicated region
    $region38: #{tpu_custom_call.1} parent=1 // pred_check
      _
    $region39: #{tpu_custom_call.1} parent=1 // pred_check_branch
      %77 = sbr.rel (0) target = $region41
    $region40: #{tpu_custom_call.1} parent=1 // pred_region
      %78 = dma.done [#allocation10], 2048
    $region41: #{tpu_custom_call.1} parent=1 // pred_fallthru
      _
    %v79 = vld [vmem:[#allocation3] sm:$0xff]
    %v80 = vld [vmem:[#allocation3 + $0x8] sm:$0xff]
    %v81 = vld [vmem:[#allocation6] sm:$0xff]
    %v82 = vld [vmem:[#allocation6 + $0x8] sm:$0xff]
    %v83 = vld [vmem:[#allocation6 + $0x10] sm:$0xff]
    %v84 = vld [vmem:[#allocation6 + $0x18] sm:$0xff]
    %v85 = vld [vmem:[#allocation6 + $0x20] sm:$0xff]
    %v86 = vld [vmem:[#allocation6 + $0x28] sm:$0xff]
    %v87 = vld [vmem:[#allocation6 + $0x30] sm:$0xff]
    %v88 = vld [vmem:[#allocation6 + $0x38] sm:$0xff]
    %v89 = vld [vmem:[%s3] sm:$0xf]
    %v91 = vlaneseq
    %v92 = vshrl.u32 %v91, 7
    %v93 = vsub.s32 0, %v92
    %v94 = vrot.slane %v89, %v93
    %v95 = vlaneseq
    %v96 = vshrl.u32 %v95, 7
    %v97 = vsub.s32 1, %v96
    %v98 = vrot.slane %v89, %v97
    %v99 = vlaneseq
    %v100 = vshrl.u32 %v99, 7
    %v101 = vsub.s32 2, %v100
    %v102 = vrot.slane %v89, %v101
    %v103 = vlaneseq
    %v104 = vshrl.u32 %v103, 7
    %v105 = vsub.s32 3, %v104
    %v106 = vrot.slane %v89, %v105
    %vm111 = vcmask 130048
    %v113 = vsel %vm111, %v79, 0
    %v116 = vsel %vm111, %v80, 0
    %118 = vmatprep.subr.mxu0 %v82
    %119 = vmatpush1.msra.mxu0 %v81
    %120 = vmatprep.subr.mxu0 %v86
    %121 = vmatpush1.msra.mxu0 %v85
    %122 = vmatprep.subr.mxu0 0.0
    %123 = vmatpush1.msra.mxu0 0.0
    %124 = vmatprep.subr.mxu0 0.0
    %125 = vmatpush1.msra.mxu0 0.0
    %126 = vmatprep.subr.mxu0 0.0
    %127 = vmatpush1.msra.mxu0 0.0
    %128 = vmatprep.subr.mxu0 0.0
    %129 = vmatpush1.msra.mxu0 0.0
    %130 = vmatprep.subr.mxu0 0.0
    %131 = vmatpush1.msra.mxu0 0.0
    %132 = vmatprep.subr.mxu0 0.0
    %133 = vmatpush1.msra.mxu0 0.0
    %134 = vmatprep.subr.mxu0 0.0
    %135 = vmatpush1.msra.mxu0 0.0
    %136 = vmatprep.subr.mxu0 0.0
    %137 = vmatpush1.msra.mxu0 0.0
    %138 = vmatprep.subr.mxu0 0.0
    %139 = vmatpush1.msra.mxu0 0.0
    %140 = vmatprep.subr.mxu0 0.0
    %141 = vmatpush1.msra.mxu0 0.0
    %142 = vmatprep.subr.mxu0 0.0
    %143 = vmatpush1.msra.mxu0 0.0
    %144 = vmatprep.subr.mxu0 0.0
    %145 = vmatpush1.msra.mxu0 0.0
    %146 = vmatprep.subr.mxu0 0.0
    %147 = vmatpush1.msra.mxu0 0.0
    %148 = vmatprep.subr.mxu0 0.0
    %149 = vmatpush1.msra.mxu0 0.0
    %150 = vmatprep.subr.mxu0 0.0
    %151 = vmatpush1.msra.mxu0 0.0
    %152 = vmatprep.subr.mxu0 0.0
    %153 = vmatpush1.msra.mxu0 0.0
    %154 = vmatprep.subr.mxu0 0.0
    %155 = vmatpush1.msra.mxu0 0.0
    %156 = vmatprep.subr.mxu0 0.0
    %157 = vmatpush1.msra.mxu0 0.0
    %158 = vmatprep.subr.mxu0 0.0
    %159 = vmatpush1.msra.mxu0 0.0
    %160 = vmatprep.subr.mxu0 0.0
    %161 = vmatpush1.msra.mxu0 0.0
    %162 = vmatprep.subr.mxu0 0.0
    %163 = vmatpush1.msra.mxu0 0.0
    %164 = vmatprep.subr.mxu0 0.0
    %165 = vmatpush1.msra.mxu0 0.0
    %166 = vmatprep.subr.mxu0 0.0
    %167 = vmatpush1.msra.mxu0 0.0
    %168 = vmatprep.subr.mxu0 0.0
    %169 = vmatpush1.msra.mxu0 0.0
    %170 = vmatprep.subr.mxu0 0.0
    %171 = vmatpush1.msra.mxu0 0.0
    %172 = vmatprep.subr.mxu0 0.0
    %173 = vmatpush1.msra.mxu0 0.0
    %174 = vmatprep.subr.mxu0 0.0
    %175 = vmatpush1.msra.mxu0 0.0
    %176 = vmatprep.subr.mxu0 0.0
    %177 = vmatpush1.msra.mxu0 0.0
    %178 = vmatprep.subr.mxu0 0.0
    %179 = vmatpush1.msra.mxu0 0.0
    %180 = vmatprep.subr.mxu0 0.0
    %181 = vmatpush1.msra.mxu0 0.0
    %182 = vmatprep.mubr.f32.mxu0 0.0
    %183 = vmatmul.mubr.f32.gmra.mrb[0].mxu0 %v113
    %v184 = vpop.f32.mrb[0].mxu0
    %v185 = vadd.f32 %v94, %v184
    %v186 = vpop.f32.mrb[0].mxu0
    %v187 = vadd.f32 %v98, %v186
    %188 = vmatprep.mubr.f32.mxu0 0.0
    %189 = vmatmul.mubr.f32.gmra.mrb[0].mxu0 %v116
    %v190 = vpop.f32.mrb[0].mxu0
    %v191 = vadd.f32 %v94, %v190
    %v192 = vpop.f32.mrb[0].mxu0
    %v193 = vadd.f32 %v98, %v192
    %194 = vdwg.mxu0
    %195 = vmatprep.subr.mxu0 %v84
    %196 = vmatpush1.msra.mxu0 %v83
    %197 = vmatprep.subr.mxu0 %v88
    %198 = vmatpush1.msra.mxu0 %v87
    %199 = vmatprep.subr.mxu0 0.0
    %200 = vmatpush1.msra.mxu0 0.0
    %201 = vmatprep.subr.mxu0 0.0
    %202 = vmatpush1.msra.mxu0 0.0
    %203 = vmatprep.subr.mxu0 0.0
    %204 = vmatpush1.msra.mxu0 0.0
    %205 = vmatprep.subr.mxu0 0.0
    %206 = vmatpush1.msra.mxu0 0.0
    %207 = vmatprep.subr.mxu0 0.0
    %208 = vmatpush1.msra.mxu0 0.0
    %209 = vmatprep.subr.mxu0 0.0
    %210 = vmatpush1.msra.mxu0 0.0
    %211 = vmatprep.subr.mxu0 0.0
    %212 = vmatpush1.msra.mxu0 0.0
    %213 = vmatprep.subr.mxu0 0.0
    %214 = vmatpush1.msra.mxu0 0.0
    %215 = vmatprep.subr.mxu0 0.0
    %216 = vmatpush1.msra.mxu0 0.0
    %217 = vmatprep.subr.mxu0 0.0
    %218 = vmatpush1.msra.mxu0 0.0
    %219 = vmatprep.subr.mxu0 0.0
    %220 = vmatpush1.msra.mxu0 0.0
    %221 = vmatprep.subr.mxu0 0.0
    %222 = vmatpush1.msra.mxu0 0.0
    %223 = vmatprep.subr.mxu0 0.0
    %224 = vmatpush1.msra.mxu0 0.0
    %225 = vmatprep.subr.mxu0 0.0
    %226 = vmatpush1.msra.mxu0 0.0
    %227 = vmatprep.subr.mxu0 0.0
    %228 = vmatpush1.msra.mxu0 0.0
    %229 = vmatprep.subr.mxu0 0.0
    %230 = vmatpush1.msra.mxu0 0.0
    %231 = vmatprep.subr.mxu0 0.0
    %232 = vmatpush1.msra.mxu0 0.0
    %233 = vmatprep.subr.mxu0 0.0
    %234 = vmatpush1.msra.mxu0 0.0
    %235 = vmatprep.subr.mxu0 0.0
    %236 = vmatpush1.msra.mxu0 0.0
    %237 = vmatprep.subr.mxu0 0.0
    %238 = vmatpush1.msra.mxu0 0.0
    %239 = vmatprep.subr.mxu0 0.0
    %240 = vmatpush1.msra.mxu0 0.0
    %241 = vmatprep.subr.mxu0 0.0
    %242 = vmatpush1.msra.mxu0 0.0
    %243 = vmatprep.subr.mxu0 0.0
    %244 = vmatpush1.msra.mxu0 0.0
    %245 = vmatprep.subr.mxu0 0.0
    %246 = vmatpush1.msra.mxu0 0.0
    %247 = vmatprep.subr.mxu0 0.0
    %248 = vmatpush1.msra.mxu0 0.0
    %249 = vmatprep.subr.mxu0 0.0
    %250 = vmatpush1.msra.mxu0 0.0
    %251 = vmatprep.subr.mxu0 0.0
    %252 = vmatpush1.msra.mxu0 0.0
    %253 = vmatprep.subr.mxu0 0.0
    %254 = vmatpush1.msra.mxu0 0.0
    %255 = vmatprep.subr.mxu0 0.0
    %256 = vmatpush1.msra.mxu0 0.0
    %257 = vmatprep.subr.mxu0 0.0
    %258 = vmatpush1.msra.mxu0 0.0
    %259 = vmatprep.mubr.f32.mxu0 0.0
    %260 = vmatmul.mubr.f32.gmra.mrb[0].mxu0 %v113
    %v261 = vpop.f32.mrb[0].mxu0
    %v262 = vadd.f32 %v102, %v261
    %v263 = vpop.f32.mrb[0].mxu0
    %v264 = vadd.f32 %v106, %v263
    %265 = vmatprep.mubr.f32.mxu0 0.0
    %266 = vmatmul.mubr.f32.gmra.mrb[0].mxu0 %v116
    %v267 = vpop.f32.mrb[0].mxu0
    %v268 = vadd.f32 %v102, %v267
    %v269 = vpop.f32.mrb[0].mxu0
    %v270 = vadd.f32 %v106, %v269
    %271 = vdwg.mxu0
    %272 = vst [vmem:[#allocation2] sm:$0xff] %v185
    %273 = vst [vmem:[#allocation2 + $0x8] sm:$0xff] %v187
    %274 = vst [vmem:[#allocation2 + $0x10] sm:$0xff] %v262
    %275 = vst [vmem:[#allocation2 + $0x18] sm:$0xff] %v264
    %276 = vst [vmem:[#allocation2 + $0x20] sm:$0xff] %v191
    %277 = vst [vmem:[#allocation2 + $0x28] sm:$0xff] %v193
    %278 = vst [vmem:[#allocation2 + $0x30] sm:$0xff] %v268
    %279 = vst [vmem:[#allocation2 + $0x38] sm:$0xff] %v270
    %v280 = vld [vmem:[#allocation8] sm:$0xff]
    %v281 = vld [vmem:[#allocation8 + $0x8] sm:$0xff]
    %v282 = vld [vmem:[#allocation8 + $0x10] sm:$0xff]
    %v283 = vld [vmem:[#allocation8 + $0x18] sm:$0xff]
    %v284 = vld [vmem:[#allocation8 + $0x20] sm:$0xff]
    %v285 = vld [vmem:[#allocation8 + $0x28] sm:$0xff]
    %v286 = vld [vmem:[#allocation8 + $0x30] sm:$0xff]
    %v287 = vld [vmem:[#allocation8 + $0x38] sm:$0xff]
    %v288 = vld [vmem:[#allocation8 + $0x40] sm:$0xff]
    %v289 = vld [vmem:[#allocation8 + $0x48] sm:$0xff]
    %v290 = vld [vmem:[#allocation8 + $0x50] sm:$0xff]
    %v291 = vld [vmem:[#allocation8 + $0x58] sm:$0xff]
    %v292 = vld [vmem:[#allocation8 + $0x60] sm:$0xff]
    %v293 = vld [vmem:[#allocation8 + $0x68] sm:$0xff]
    %v294 = vld [vmem:[#allocation8 + $0x70] sm:$0xff]
    %v295 = vld [vmem:[#allocation8 + $0x78] sm:$0xff]
    %v296 = vld [vmem:[#allocation8 + $0x80] sm:$0xff]
    %v297 = vld [vmem:[#allocation8 + $0x88] sm:$0xff]
    %v298 = vld [vmem:[#allocation8 + $0x90] sm:$0xff]
    %v299 = vld [vmem:[#allocation8 + $0x98] sm:$0xff]
    %v300 = vld [vmem:[#allocation8 + $0xa0] sm:$0xff]
    %v301 = vld [vmem:[#allocation8 + $0xa8] sm:$0xff]
    %v302 = vld [vmem:[#allocation8 + $0xb0] sm:$0xff]
    %v303 = vld [vmem:[#allocation8 + $0xb8] sm:$0xff]
    %v304 = vld [vmem:[#allocation8 + $0xc0] sm:$0xff]
    %v305 = vld [vmem:[#allocation8 + $0xc8] sm:$0xff]
    %v306 = vld [vmem:[#allocation8 + $0xd0] sm:$0xff]
    %v307 = vld [vmem:[#allocation8 + $0xd8] sm:$0xff]
    %v308 = vld [vmem:[#allocation8 + $0xe0] sm:$0xff]
    %v309 = vld [vmem:[#allocation8 + $0xe8] sm:$0xff]
    %v310 = vld [vmem:[#allocation8 + $0xf0] sm:$0xff]
    %v311 = vld [vmem:[#allocation8 + $0xf8] sm:$0xff]
    %v312 = vld [vmem:[#allocation8 + $0x100] sm:$0xff]
    %v313 = vld [vmem:[#allocation8 + $0x108] sm:$0xff]
    %v314 = vld [vmem:[#allocation8 + $0x110] sm:$0xff]
    %v315 = vld [vmem:[#allocation8 + $0x118] sm:$0xff]
    %v316 = vld [vmem:[#allocation8 + $0x120] sm:$0xff]
    %v317 = vld [vmem:[#allocation8 + $0x128] sm:$0xff]
    %v318 = vld [vmem:[#allocation8 + $0x130] sm:$0xff]
    %v319 = vld [vmem:[#allocation8 + $0x138] sm:$0xff]
    %v320 = vld [vmem:[#allocation8 + $0x140] sm:$0xff]
    %v321 = vld [vmem:[#allocation8 + $0x148] sm:$0xff]
    %v322 = vld [vmem:[#allocation8 + $0x150] sm:$0xff]
    %v323 = vld [vmem:[#allocation8 + $0x158] sm:$0xff]
    %v324 = vld [vmem:[#allocation8 + $0x160] sm:$0xff]
    %v325 = vld [vmem:[#allocation8 + $0x168] sm:$0xff]
    %v326 = vld [vmem:[#allocation8 + $0x170] sm:$0xff]
    %v327 = vld [vmem:[#allocation8 + $0x178] sm:$0xff]
    %v328 = vld [vmem:[#allocation8 + $0x180] sm:$0xff]
    %v329 = vld [vmem:[#allocation8 + $0x188] sm:$0xff]
    %v330 = vld [vmem:[#allocation8 + $0x190] sm:$0xff]
    %v331 = vld [vmem:[#allocation8 + $0x198] sm:$0xff]
    %v332 = vld [vmem:[#allocation8 + $0x1a0] sm:$0xff]
    %v333 = vld [vmem:[#allocation8 + $0x1a8] sm:$0xff]
    %v334 = vld [vmem:[#allocation8 + $0x1b0] sm:$0xff]
    %v335 = vld [vmem:[#allocation8 + $0x1b8] sm:$0xff]
    %v336 = vld [vmem:[#allocation8 + $0x1c0] sm:$0xff]
    %v337 = vld [vmem:[#allocation8 + $0x1c8] sm:$0xff]
    %v338 = vld [vmem:[#allocation8 + $0x1d0] sm:$0xff]
    %v339 = vld [vmem:[#allocation8 + $0x1d8] sm:$0xff]
    %v340 = vld [vmem:[#allocation8 + $0x1e0] sm:$0xff]
    %v341 = vld [vmem:[#allocation8 + $0x1e8] sm:$0xff]
    %v342 = vld [vmem:[#allocation8 + $0x1f0] sm:$0xff]
    %v343 = vld [vmem:[#allocation8 + $0x1f8] sm:$0xff]
    %v344 = vld [vmem:[#allocation2] sm:$0x3]
    %v345 = vld [vmem:[#allocation2 + $0x8] sm:$0x3]
    %v346 = vld [vmem:[#allocation2 + $0x10] sm:$0x3]
    %v347 = vld [vmem:[#allocation2 + $0x18] sm:$0x3]
    %348 = vmatprep.subr.mxu0 %v281
    %349 = vmatpush1.msra.mxu0 %v280
    %350 = vmatprep.subr.mxu0 %v285
    %351 = vmatpush1.msra.mxu0 %v284
    %352 = vmatprep.subr.mxu0 %v289
    %353 = vmatpush1.msra.mxu0 %v288
    %354 = vmatprep.subr.mxu0 %v293
    %355 = vmatpush1.msra.mxu0 %v292
    %356 = vmatprep.subr.mxu0 %v297
    %357 = vmatpush1.msra.mxu0 %v296
    %358 = vmatprep.subr.mxu0 %v301
    %359 = vmatpush1.msra.mxu0 %v300
    %360 = vmatprep.subr.mxu0 %v305
    %361 = vmatpush1.msra.mxu0 %v304
    %362 = vmatprep.subr.mxu0 %v309
    %363 = vmatpush1.msra.mxu0 %v308
    %364 = vmatprep.subr.mxu0 %v313
    %365 = vmatpush1.msra.mxu0 %v312
    %366 = vmatprep.subr.mxu0 %v317
    %367 = vmatpush1.msra.mxu0 %v316
    %368 = vmatprep.subr.mxu0 %v321
    %369 = vmatpush1.msra.mxu0 %v320
    %370 = vmatprep.subr.mxu0 %v325
    %371 = vmatpush1.msra.mxu0 %v324
    %372 = vmatprep.subr.mxu0 %v329
    %373 = vmatpush1.msra.mxu0 %v328
    %374 = vmatprep.subr.mxu0 %v333
    %375 = vmatpush1.msra.mxu0 %v332
    %376 = vmatprep.subr.mxu0 %v337
    %377 = vmatpush1.msra.mxu0 %v336
    %378 = vmatprep.subr.mxu0 %v341
    %379 = vmatpush1.msra.mxu0 %v340
    %380 = vmatprep.subr.mxu0 0.0
    %381 = vmatpush1.msra.mxu0 0.0
    %382 = vmatprep.subr.mxu0 0.0
    %383 = vmatpush1.msra.mxu0 0.0
    %384 = vmatprep.subr.mxu0 0.0
    %385 = vmatpush1.msra.mxu0 0.0
    %386 = vmatprep.subr.mxu0 0.0
    %387 = vmatpush1.msra.mxu0 0.0
    %388 = vmatprep.subr.mxu0 0.0
    %389 = vmatpush1.msra.mxu0 0.0
    %390 = vmatprep.subr.mxu0 0.0
    %391 = vmatpush1.msra.mxu0 0.0
    %392 = vmatprep.subr.mxu0 0.0
    %393 = vmatpush1.msra.mxu0 0.0
    %394 = vmatprep.subr.mxu0 0.0
    %395 = vmatpush1.msra.mxu0 0.0
    %396 = vmatprep.subr.mxu0 0.0
    %397 = vmatpush1.msra.mxu0 0.0
    %398 = vmatprep.subr.mxu0 0.0
    %399 = vmatpush1.msra.mxu0 0.0
    %400 = vmatprep.subr.mxu0 0.0
    %401 = vmatpush1.msra.mxu0 0.0
    %402 = vmatprep.subr.mxu0 0.0
    %403 = vmatpush1.msra.mxu0 0.0
    %404 = vmatprep.subr.mxu0 0.0
    %405 = vmatpush1.msra.mxu0 0.0
    %406 = vmatprep.subr.mxu0 0.0
    %407 = vmatpush1.msra.mxu0 0.0
    %408 = vmatprep.subr.mxu0 0.0
    %409 = vmatpush1.msra.mxu0 0.0
    %410 = vmatprep.subr.mxu0 0.0
    %411 = vmatpush1.msra.mxu0 0.0
    %412 = vmatprep.mubr.f32.mxu0 0.0
    %413 = vmatmul.mubr.f32.gmra.mrb[0].mxu0 0.0
    %v414 = vpop.f32.mrb[0].mxu0
    %v415 = vadd.f32 0.0, %v414
    %v416 = vpop.f32.mrb[0].mxu0
    %v417 = vadd.f32 0.0, %v416
    %418 = vdwg.mxu0
    %419 = vmatprep.subr.mxu0 %v283
    %420 = vmatpush1.msra.mxu0 %v282
    %421 = vmatprep.subr.mxu0 %v287
    %422 = vmatpush1.msra.mxu0 %v286
    %423 = vmatprep.subr.mxu0 %v291
    %424 = vmatpush1.msra.mxu0 %v290
    %425 = vmatprep.subr.mxu0 %v295
    %426 = vmatpush1.msra.mxu0 %v294
    %427 = vmatprep.subr.mxu0 %v299
    %428 = vmatpush1.msra.mxu0 %v298
    %429 = vmatprep.subr.mxu0 %v303
    %430 = vmatpush1.msra.mxu0 %v302
    %431 = vmatprep.subr.mxu0 %v307
    %432 = vmatpush1.msra.mxu0 %v306
    %433 = vmatprep.subr.mxu0 %v311
    %434 = vmatpush1.msra.mxu0 %v310
    %435 = vmatprep.subr.mxu0 %v315
    %436 = vmatpush1.msra.mxu0 %v314
    %437 = vmatprep.subr.mxu0 %v319
    %438 = vmatpush1.msra.mxu0 %v318
    %439 = vmatprep.subr.mxu0 %v323
    %440 = vmatpush1.msra.mxu0 %v322
    %441 = vmatprep.subr.mxu0 %v327
    %442 = vmatpush1.msra.mxu0 %v326
    %443 = vmatprep.subr.mxu0 %v331
    %444 = vmatpush1.msra.mxu0 %v330
    %445 = vmatprep.subr.mxu0 %v335
    %446 = vmatpush1.msra.mxu0 %v334
    %447 = vmatprep.subr.mxu0 %v339
    %448 = vmatpush1.msra.mxu0 %v338
    %449 = vmatprep.subr.mxu0 %v343
    %450 = vmatpush1.msra.mxu0 %v342
    %451 = vmatprep.subr.mxu0 0.0
    %452 = vmatpush1.msra.mxu0 0.0
    %453 = vmatprep.subr.mxu0 0.0
    %454 = vmatpush1.msra.mxu0 0.0
    %455 = vmatprep.subr.mxu0 0.0
    %456 = vmatpush1.msra.mxu0 0.0
    %457 = vmatprep.subr.mxu0 0.0
    %458 = vmatpush1.msra.mxu0 0.0
    %459 = vmatprep.subr.mxu0 0.0
    %460 = vmatpush1.msra.mxu0 0.0
    %461 = vmatprep.subr.mxu0 0.0
    %462 = vmatpush1.msra.mxu0 0.0
    %463 = vmatprep.subr.mxu0 0.0
    %464 = vmatpush1.msra.mxu0 0.0
    %465 = vmatprep.subr.mxu0 0.0
    %466 = vmatpush1.msra.mxu0 0.0
    %467 = vmatprep.subr.mxu0 0.0
    %468 = vmatpush1.msra.mxu0 0.0
    %469 = vmatprep.subr.mxu0 0.0
    %470 = vmatpush1.msra.mxu0 0.0
    %471 = vmatprep.subr.mxu0 0.0
    %472 = vmatpush1.msra.mxu0 0.0
    %473 = vmatprep.subr.mxu0 0.0
    %474 = vmatpush1.msra.mxu0 0.0
    %475 = vmatprep.subr.mxu0 0.0
    %476 = vmatpush1.msra.mxu0 0.0
    %477 = vmatprep.subr.mxu0 0.0
    %478 = vmatpush1.msra.mxu0 0.0
    %479 = vmatprep.subr.mxu0 0.0
    %480 = vmatpush1.msra.mxu0 0.0
    %481 = vmatprep.subr.mxu0 0.0
    %482 = vmatpush1.msra.mxu0 0.0
    %483 = vmatprep.mubr.f32.mxu0 0.0
    %484 = vmatmul.mubr.f32.gmra.mrb[0].mxu0 0.0
    %v485 = vpop.f32.mrb[0].mxu0
    %v486 = vadd.f32 0.0, %v485
    %v487 = vpop.f32.mrb[0].mxu0
    %v488 = vadd.f32 0.0, %v487
    %489 = vdwg.mxu0
    %v490 = vadd.f32 %v344, %v415
    %v491 = vadd.f32 %v345, %v417
    %v492 = vadd.f32 %v346, %v486
    %v493 = vadd.f32 %v347, %v488
    %v494 = vxor.u32 %v490, 2147483648
    %v495 = vmul.f32 %v494, 1.442695
    %v496 = vpow.pop %v495
    %v497 = vadd.f32 %v496, 1.0
    %v498 = vrcp.pop %v497
    %v499 = vmul.f32 1.0, %v498
    %v500 = vxor.u32 %v491, 2147483648
    %v501 = vmul.f32 %v500, 1.442695
    %v502 = vpow.pop %v501
    %v503 = vadd.f32 %v502, 1.0
    %v504 = vrcp.pop %v503
    %v505 = vmul.f32 1.0, %v504
    %v506 = vtanh.pop %v492
    %v507 = vxor.u32 %v493, 2147483648
    %v508 = vmul.f32 %v507, 1.442695
    %v509 = vpow.pop %v508
    %v510 = vadd.f32 %v509, 1.0
    %v511 = vrcp.pop %v510
    %v512 = vmul.f32 1.0, %v511
    %v513 = vmul.f32 %v505, 0.0
    %v514 = vmul.f32 %v499, %v506
    %v515 = vadd.f32 %v513, %v514
    %v516 = vtanh.pop %v515
    %v517 = vmul.f32 %v512, %v516
    %v518 = vld [vmem:[#allocation2] sm:$0xc]
    %v519 = vld [vmem:[#allocation2 + $0x8] sm:$0xc]
    %v520 = vld [vmem:[#allocation2 + $0x10] sm:$0xc]
    %v521 = vld [vmem:[#allocation2 + $0x18] sm:$0xc]
    %522 = vmatprep.subr.mxu0 %v281
    %523 = vmatpush1.msra.mxu0 %v280
    %524 = vmatprep.subr.mxu0 %v285
    %525 = vmatpush1.msra.mxu0 %v284
    %526 = vmatprep.subr.mxu0 %v289
    %527 = vmatpush1.msra.mxu0 %v288
    %528 = vmatprep.subr.mxu0 %v293
    %529 = vmatpush1.msra.mxu0 %v292
    %530 = vmatprep.subr.mxu0 %v297
    %531 = vmatpush1.msra.mxu0 %v296
    %532 = vmatprep.subr.mxu0 %v301
    %533 = vmatpush1.msra.mxu0 %v300
    %534 = vmatprep.subr.mxu0 %v305
    %535 = vmatpush1.msra.mxu0 %v304
    %536 = vmatprep.subr.mxu0 %v309
    %537 = vmatpush1.msra.mxu0 %v308
    %538 = vmatprep.subr.mxu0 %v313
    %539 = vmatpush1.msra.mxu0 %v312
    %540 = vmatprep.subr.mxu0 %v317
    %541 = vmatpush1.msra.mxu0 %v316
    %542 = vmatprep.subr.mxu0 %v321
    %543 = vmatpush1.msra.mxu0 %v320
    %544 = vmatprep.subr.mxu0 %v325
    %545 = vmatpush1.msra.mxu0 %v324
    %546 = vmatprep.subr.mxu0 %v329
    %547 = vmatpush1.msra.mxu0 %v328
    %548 = vmatprep.subr.mxu0 %v333
    %549 = vmatpush1.msra.mxu0 %v332
    %550 = vmatprep.subr.mxu0 %v337
    %551 = vmatpush1.msra.mxu0 %v336
    %552 = vmatprep.subr.mxu0 %v341
    %553 = vmatpush1.msra.mxu0 %v340
    %554 = vmatprep.subr.mxu0 0.0
    %555 = vmatpush1.msra.mxu0 0.0
    %556 = vmatprep.subr.mxu0 0.0
    %557 = vmatpush1.msra.mxu0 0.0
    %558 = vmatprep.subr.mxu0 0.0
    %559 = vmatpush1.msra.mxu0 0.0
    %560 = vmatprep.subr.mxu0 0.0
    %561 = vmatpush1.msra.mxu0 0.0
    %562 = vmatprep.subr.mxu0 0.0
    %563 = vmatpush1.msra.mxu0 0.0
    %564 = vmatprep.subr.mxu0 0.0
    %565 = vmatpush1.msra.mxu0 0.0
    %566 = vmatprep.subr.mxu0 0.0
    %567 = vmatpush1.msra.mxu0 0.0
    %568 = vmatprep.subr.mxu0 0.0
    %569 = vmatpush1.msra.mxu0 0.0
    %570 = vmatprep.subr.mxu0 0.0
    %571 = vmatpush1.msra.mxu0 0.0
    %572 = vmatprep.subr.mxu0 0.0
    %573 = vmatpush1.msra.mxu0 0.0
    %574 = vmatprep.subr.mxu0 0.0
    %575 = vmatpush1.msra.mxu0 0.0
    %576 = vmatprep.subr.mxu0 0.0
    %577 = vmatpush1.msra.mxu0 0.0
    %578 = vmatprep.subr.mxu0 0.0
    %579 = vmatpush1.msra.mxu0 0.0
    %580 = vmatprep.subr.mxu0 0.0
    %581 = vmatpush1.msra.mxu0 0.0
    %582 = vmatprep.subr.mxu0 0.0
    %583 = vmatpush1.msra.mxu0 0.0
    %584 = vmatprep.subr.mxu0 0.0
    %585 = vmatpush1.msra.mxu0 0.0
    %586 = vmatprep.mubr.f32.mxu0 0.0
    %587 = vmatmul.mubr.f32.gmra.mrb[0].mxu0 %v517
    %v588 = vpop.f32.mrb[0].mxu0
    %v589 = vadd.f32 0.0, %v588
    %v590 = vpop.f32.mrb[0].mxu0
    %v591 = vadd.f32 0.0, %v590
    %592 = vdwg.mxu0
    %593 = vmatprep.subr.mxu0 %v283
    %594 = vmatpush1.msra.mxu0 %v282
    %595 = vmatprep.subr.mxu0 %v287
    %596 = vmatpush1.msra.mxu0 %v286
    %597 = vmatprep.subr.mxu0 %v291
    %598 = vmatpush1.msra.mxu0 %v290
    %599 = vmatprep.subr.mxu0 %v295
    %600 = vmatpush1.msra.mxu0 %v294
    %601 = vmatprep.subr.mxu0 %v299
    %602 = vmatpush1.msra.mxu0 %v298
    %603 = vmatprep.subr.mxu0 %v303
    %604 = vmatpush1.msra.mxu0 %v302
    %605 = vmatprep.subr.mxu0 %v307
    %606 = vmatpush1.msra.mxu0 %v306
    %607 = vmatprep.subr.mxu0 %v311
    %608 = vmatpush1.msra.mxu0 %v310
    %609 = vmatprep.subr.mxu0 %v315
    %610 = vmatpush1.msra.mxu0 %v314
    %611 = vmatprep.subr.mxu0 %v319
    %612 = vmatpush1.msra.mxu0 %v318
    %613 = vmatprep.subr.mxu0 %v323
    %614 = vmatpush1.msra.mxu0 %v322
    %615 = vmatprep.subr.mxu0 %v327
    %616 = vmatpush1.msra.mxu0 %v326
    %617 = vmatprep.subr.mxu0 %v331
    %618 = vmatpush1.msra.mxu0 %v330
    %619 = vmatprep.subr.mxu0 %v335
    %620 = vmatpush1.msra.mxu0 %v334
    %621 = vmatprep.subr.mxu0 %v339
    %622 = vmatpush1.msra.mxu0 %v338
    %623 = vmatprep.subr.mxu0 %v343
    %624 = vmatpush1.msra.mxu0 %v342
    %625 = vmatprep.subr.mxu0 0.0
    %626 = vmatpush1.msra.mxu0 0.0
    %627 = vmatprep.subr.mxu0 0.0
    %628 = vmatpush1.msra.mxu0 0.0
    %629 = vmatprep.subr.mxu0 0.0
    %630 = vmatpush1.msra.mxu0 0.0
    %631 = vmatprep.subr.mxu0 0.0
    %632 = vmatpush1.msra.mxu0 0.0
    %633 = vmatprep.subr.mxu0 0.0
    %634 = vmatpush1.msra.mxu0 0.0
    %635 = vmatprep.subr.mxu0 0.0
    %636 = vmatpush1.msra.mxu0 0.0
    %637 = vmatprep.subr.mxu0 0.0
    %638 = vmatpush1.msra.mxu0 0.0
    %639 = vmatprep.subr.mxu0 0.0
    %640 = vmatpush1.msra.mxu0 0.0
    %641 = vmatprep.subr.mxu0 0.0
    %642 = vmatpush1.msra.mxu0 0.0
    %643 = vmatprep.subr.mxu0 0.0
    %644 = vmatpush1.msra.mxu0 0.0
    %645 = vmatprep.subr.mxu0 0.0
    %646 = vmatpush1.msra.mxu0 0.0
    %647 = vmatprep.subr.mxu0 0.0
    %648 = vmatpush1.msra.mxu0 0.0
    %649 = vmatprep.subr.mxu0 0.0
    %650 = vmatpush1.msra.mxu0 0.0
    %651 = vmatprep.subr.mxu0 0.0
    %652 = vmatpush1.msra.mxu0 0.0
    %653 = vmatprep.subr.mxu0 0.0
    %654 = vmatpush1.msra.mxu0 0.0
    %655 = vmatprep.subr.mxu0 0.0
    %656 = vmatpush1.msra.mxu0 0.0
    %657 = vmatprep.mubr.f32.mxu0 0.0
    %658 = vmatmul.mubr.f32.gmra.mrb[0].mxu0 %v517
    %v659 = vpop.f32.mrb[0].mxu0
    %v660 = vadd.f32 0.0, %v659
    %v661 = vpop.f32.mrb[0].mxu0
    %v662 = vadd.f32 0.0, %v661
    %663 = vdwg.mxu0
    %v668 = vrot.slane %v589, 6
    %v669 = vrot.slane %v591, 6
    %v670 = vrot.slane %v660, 6
    %v671 = vrot.slane %v662, 6
    %v676 = vadd.f32 %v518, %v668
    %v677 = vadd.f32 %v519, %v669
    %v678 = vadd.f32 %v520, %v670
    %v679 = vadd.f32 %v521, %v671
    %v680 = vxor.u32 %v676, 2147483648
    %v681 = vmul.f32 %v680, 1.442695
    %v682 = vpow.pop %v681
    %v683 = vadd.f32 %v682, 1.0
    %v684 = vrcp.pop %v683
    %v685 = vmul.f32 1.0, %v684
    %v686 = vxor.u32 %v677, 2147483648
    %v687 = vmul.f32 %v686, 1.442695
    %v688 = vpow.pop %v687
    %v689 = vadd.f32 %v688, 1.0
    %v690 = vrcp.pop %v689
    %v691 = vmul.f32 1.0, %v690
    %v692 = vtanh.pop %v678
    %v693 = vxor.u32 %v679, 2147483648
    %v694 = vmul.f32 %v693, 1.442695
    %v695 = vpow.pop %v694
    %v696 = vadd.f32 %v695, 1.0
    %v697 = vrcp.pop %v696
    %v698 = vmul.f32 1.0, %v697
    %v700 = vrot.slane %v515, 6
    %v702 = vmul.f32 %v691, %v700
    %v703 = vmul.f32 %v685, %v692
    %v704 = vadd.f32 %v702, %v703
    %v705 = vtanh.pop %v704
    %v706 = vmul.f32 %v698, %v705
    %v707 = vld [vmem:[#allocation2] sm:$0x30]
    %v708 = vld [vmem:[#allocation2 + $0x8] sm:$0x30]
    %v709 = vld [vmem:[#allocation2 + $0x10] sm:$0x30]
    %v710 = vld [vmem:[#allocation2 + $0x18] sm:$0x30]
    %v712 = vrot.slane %v706, 2
    %714 = vmatprep.subr.mxu0 %v281
    %715 = vmatpush1.msra.mxu0 %v280
    %716 = vmatprep.subr.mxu0 %v285
    %717 = vmatpush1.msra.mxu0 %v284
    %718 = vmatprep.subr.mxu0 %v289
    %719 = vmatpush1.msra.mxu0 %v288
    %720 = vmatprep.subr.mxu0 %v293
    %721 = vmatpush1.msra.mxu0 %v292
    %722 = vmatprep.subr.mxu0 %v297
    %723 = vmatpush1.msra.mxu0 %v296
    %724 = vmatprep.subr.mxu0 %v301
    %725 = vmatpush1.msra.mxu0 %v300
    %726 = vmatprep.subr.mxu0 %v305
    %727 = vmatpush1.msra.mxu0 %v304
    %728 = vmatprep.subr.mxu0 %v309
    %729 = vmatpush1.msra.mxu0 %v308
    %730 = vmatprep.subr.mxu0 %v313
    %731 = vmatpush1.msra.mxu0 %v312
    %732 = vmatprep.subr.mxu0 %v317
    %733 = vmatpush1.msra.mxu0 %v316
    %734 = vmatprep.subr.mxu0 %v321
    %735 = vmatpush1.msra.mxu0 %v320
    %736 = vmatprep.subr.mxu0 %v325
    %737 = vmatpush1.msra.mxu0 %v324
    %738 = vmatprep.subr.mxu0 %v329
    %739 = vmatpush1.msra.mxu0 %v328
    %740 = vmatprep.subr.mxu0 %v333
    %741 = vmatpush1.msra.mxu0 %v332
    %742 = vmatprep.subr.mxu0 %v337
    %743 = vmatpush1.msra.mxu0 %v336
    %744 = vmatprep.subr.mxu0 %v341
    %745 = vmatpush1.msra.mxu0 %v340
    %746 = vmatprep.subr.mxu0 0.0
    %747 = vmatpush1.msra.mxu0 0.0
    %748 = vmatprep.subr.mxu0 0.0
    %749 = vmatpush1.msra.mxu0 0.0
    %750 = vmatprep.subr.mxu0 0.0
    %751 = vmatpush1.msra.mxu0 0.0
    %752 = vmatprep.subr.mxu0 0.0
    %753 = vmatpush1.msra.mxu0 0.0
    %754 = vmatprep.subr.mxu0 0.0
    %755 = vmatpush1.msra.mxu0 0.0
    %756 = vmatprep.subr.mxu0 0.0
    %757 = vmatpush1.msra.mxu0 0.0
    %758 = vmatprep.subr.mxu0 0.0
    %759 = vmatpush1.msra.mxu0 0.0
    %760 = vmatprep.subr.mxu0 0.0
    %761 = vmatpush1.msra.mxu0 0.0
    %762 = vmatprep.subr.mxu0 0.0
    %763 = vmatpush1.msra.mxu0 0.0
    %764 = vmatprep.subr.mxu0 0.0
    %765 = vmatpush1.msra.mxu0 0.0
    %766 = vmatprep.subr.mxu0 0.0
    %767 = vmatpush1.msra.mxu0 0.0
    %768 = vmatprep.subr.mxu0 0.0
    %769 = vmatpush1.msra.mxu0 0.0
    %770 = vmatprep.subr.mxu0 0.0
    %771 = vmatpush1.msra.mxu0 0.0
    %772 = vmatprep.subr.mxu0 0.0
    %773 = vmatpush1.msra.mxu0 0.0
    %774 = vmatprep.subr.mxu0 0.0
    %775 = vmatpush1.msra.mxu0 0.0
    %776 = vmatprep.subr.mxu0 0.0
    %777 = vmatpush1.msra.mxu0 0.0
    %778 = vmatprep.mubr.f32.mxu0 0.0
    %779 = vmatmul.mubr.f32.gmra.mrb[0].mxu0 %v712
    %v780 = vpop.f32.mrb[0].mxu0
    %v781 = vadd.f32 0.0, %v780
    %v782 = vpop.f32.mrb[0].mxu0
    %v783 = vadd.f32 0.0, %v782
    %784 = vdwg.mxu0
    %785 = vmatprep.subr.mxu0 %v283
    %786 = vmatpush1.msra.mxu0 %v282
    %787 = vmatprep.subr.mxu0 %v287
    %788 = vmatpush1.msra.mxu0 %v286
    %789 = vmatprep.subr.mxu0 %v291
    %790 = vmatpush1.msra.mxu0 %v290
    %791 = vmatprep.subr.mxu0 %v295
    %792 = vmatpush1.msra.mxu0 %v294
    %793 = vmatprep.subr.mxu0 %v299
    %794 = vmatpush1.msra.mxu0 %v298
    %795 = vmatprep.subr.mxu0 %v303
    %796 = vmatpush1.msra.mxu0 %v302
    %797 = vmatprep.subr.mxu0 %v307
    %798 = vmatpush1.msra.mxu0 %v306
    %799 = vmatprep.subr.mxu0 %v311
    %800 = vmatpush1.msra.mxu0 %v310
    %801 = vmatprep.subr.mxu0 %v315
    %802 = vmatpush1.msra.mxu0 %v314
    %803 = vmatprep.subr.mxu0 %v319
    %804 = vmatpush1.msra.mxu0 %v318
    %805 = vmatprep.subr.mxu0 %v323
    %806 = vmatpush1.msra.mxu0 %v322
    %807 = vmatprep.subr.mxu0 %v327
    %808 = vmatpush1.msra.mxu0 %v326
    %809 = vmatprep.subr.mxu0 %v331
    %810 = vmatpush1.msra.mxu0 %v330
    %811 = vmatprep.subr.mxu0 %v335
    %812 = vmatpush1.msra.mxu0 %v334
    %813 = vmatprep.subr.mxu0 %v339
    %814 = vmatpush1.msra.mxu0 %v338
    %815 = vmatprep.subr.mxu0 %v343
    %816 = vmatpush1.msra.mxu0 %v342
    %817 = vmatprep.subr.mxu0 0.0
    %818 = vmatpush1.msra.mxu0 0.0
    %819 = vmatprep.subr.mxu0 0.0
    %820 = vmatpush1.msra.mxu0 0.0
    %821 = vmatprep.subr.mxu0 0.0
    %822 = vmatpush1.msra.mxu0 0.0
    %823 = vmatprep.subr.mxu0 0.0
    %824 = vmatpush1.msra.mxu0 0.0
    %825 = vmatprep.subr.mxu0 0.0
    %826 = vmatpush1.msra.mxu0 0.0
    %827 = vmatprep.subr.mxu0 0.0
    %828 = vmatpush1.msra.mxu0 0.0
    %829 = vmatprep.subr.mxu0 0.0
    %830 = vmatpush1.msra.mxu0 0.0
    %831 = vmatprep.subr.mxu0 0.0
    %832 = vmatpush1.msra.mxu0 0.0
    %833 = vmatprep.subr.mxu0 0.0
    %834 = vmatpush1.msra.mxu0 0.0
    %835 = vmatprep.subr.mxu0 0.0
    %836 = vmatpush1.msra.mxu0 0.0
    %837 = vmatprep.subr.mxu0 0.0
    %838 = vmatpush1.msra.mxu0 0.0
    %839 = vmatprep.subr.mxu0 0.0
    %840 = vmatpush1.msra.mxu0 0.0
    %841 = vmatprep.subr.mxu0 0.0
    %842 = vmatpush1.msra.mxu0 0.0
    %843 = vmatprep.subr.mxu0 0.0
    %844 = vmatpush1.msra.mxu0 0.0
    %845 = vmatprep.subr.mxu0 0.0
    %846 = vmatpush1.msra.mxu0 0.0
    %847 = vmatprep.subr.mxu0 0.0
    %848 = vmatpush1.msra.mxu0 0.0
    %849 = vmatprep.mubr.f32.mxu0 0.0
    %850 = vmatmul.mubr.f32.gmra.mrb[0].mxu0 %v712
    %v851 = vpop.f32.mrb[0].mxu0
    %v852 = vadd.f32 0.0, %v851
    %v853 = vpop.f32.mrb[0].mxu0
    %v854 = vadd.f32 0.0, %v853
    %855 = vdwg.mxu0
    %v860 = vrot.slane %v781, 4
    %v861 = vrot.slane %v783, 4
    %v862 = vrot.slane %v852, 4
    %v863 = vrot.slane %v854, 4
    %v868 = vadd.f32 %v707, %v860
    %v869 = vadd.f32 %v708, %v861
    %v870 = vadd.f32 %v709, %v862
    %v871 = vadd.f32 %v710, %v863
    %v872 = vxor.u32 %v868, 2147483648
    %v873 = vmul.f32 %v872, 1.442695
    %v874 = vpow.pop %v873
    %v875 = vadd.f32 %v874, 1.0
    %v876 = vrcp.pop %v875
    %v877 = vmul.f32 1.0, %v876
    %v878 = vxor.u32 %v869, 2147483648
    %v879 = vmul.f32 %v878, 1.442695
    %v880 = vpow.pop %v879
    %v881 = vadd.f32 %v880, 1.0
    %v882 = vrcp.pop %v881
    %v883 = vmul.f32 1.0, %v882
    %v884 = vtanh.pop %v870
    %v885 = vxor.u32 %v871, 2147483648
    %v886 = vmul.f32 %v885, 1.442695
    %v887 = vpow.pop %v886
    %v888 = vadd.f32 %v887, 1.0
    %v889 = vrcp.pop %v888
    %v890 = vmul.f32 1.0, %v889
    %v892 = vrot.slane %v704, 6
    %v894 = vmul.f32 %v883, %v892
    %v895 = vmul.f32 %v877, %v884
    %v896 = vadd.f32 %v894, %v895
    %v897 = vtanh.pop %v896
    %v898 = vmul.f32 %v890, %v897
    %v899 = vld [vmem:[#allocation2] sm:$0xc0]
    %v900 = vld [vmem:[#allocation2 + $0x8] sm:$0xc0]
    %v901 = vld [vmem:[#allocation2 + $0x10] sm:$0xc0]
    %v902 = vld [vmem:[#allocation2 + $0x18] sm:$0xc0]
    %v904 = vrot.slane %v898, 4
    %906 = vmatprep.subr.mxu0 %v281
    %907 = vmatpush1.msra.mxu0 %v280
    %908 = vmatprep.subr.mxu0 %v285
    %909 = vmatpush1.msra.mxu0 %v284
    %910 = vmatprep.subr.mxu0 %v289
    %911 = vmatpush1.msra.mxu0 %v288
    %912 = vmatprep.subr.mxu0 %v293
    %913 = vmatpush1.msra.mxu0 %v292
    %914 = vmatprep.subr.mxu0 %v297
    %915 = vmatpush1.msra.mxu0 %v296
    %916 = vmatprep.subr.mxu0 %v301
    %917 = vmatpush1.msra.mxu0 %v300
    %918 = vmatprep.subr.mxu0 %v305
    %919 = vmatpush1.msra.mxu0 %v304
    %920 = vmatprep.subr.mxu0 %v309
    %921 = vmatpush1.msra.mxu0 %v308
    %922 = vmatprep.subr.mxu0 %v313
    %923 = vmatpush1.msra.mxu0 %v312
    %924 = vmatprep.subr.mxu0 %v317
    %925 = vmatpush1.msra.mxu0 %v316
    %926 = vmatprep.subr.mxu0 %v321
    %927 = vmatpush1.msra.mxu0 %v320
    %928 = vmatprep.subr.mxu0 %v325
    %929 = vmatpush1.msra.mxu0 %v324
    %930 = vmatprep.subr.mxu0 %v329
    %931 = vmatpush1.msra.mxu0 %v328
    %932 = vmatprep.subr.mxu0 %v333
    %933 = vmatpush1.msra.mxu0 %v332
    %934 = vmatprep.subr.mxu0 %v337
    %935 = vmatpush1.msra.mxu0 %v336
    %936 = vmatprep.subr.mxu0 %v341
    %937 = vmatpush1.msra.mxu0 %v340
    %938 = vmatprep.subr.mxu0 0.0
    %939 = vmatpush1.msra.mxu0 0.0
    %940 = vmatprep.subr.mxu0 0.0
    %941 = vmatpush1.msra.mxu0 0.0
    %942 = vmatprep.subr.mxu0 0.0
    %943 = vmatpush1.msra.mxu0 0.0
    %944 = vmatprep.subr.mxu0 0.0
    %945 = vmatpush1.msra.mxu0 0.0
    %946 = vmatprep.subr.mxu0 0.0
    %947 = vmatpush1.msra.mxu0 0.0
    %948 = vmatprep.subr.mxu0 0.0
    %949 = vmatpush1.msra.mxu0 0.0
    %950 = vmatprep.subr.mxu0 0.0
    %951 = vmatpush1.msra.mxu0 0.0
    %952 = vmatprep.subr.mxu0 0.0
    %953 = vmatpush1.msra.mxu0 0.0
    %954 = vmatprep.subr.mxu0 0.0
    %955 = vmatpush1.msra.mxu0 0.0
    %956 = vmatprep.subr.mxu0 0.0
    %957 = vmatpush1.msra.mxu0 0.0
    %958 = vmatprep.subr.mxu0 0.0
    %959 = vmatpush1.msra.mxu0 0.0
    %960 = vmatprep.subr.mxu0 0.0
    %961 = vmatpush1.msra.mxu0 0.0
    %962 = vmatprep.subr.mxu0 0.0
    %963 = vmatpush1.msra.mxu0 0.0
    %964 = vmatprep.subr.mxu0 0.0
    %965 = vmatpush1.msra.mxu0 0.0
    %966 = vmatprep.subr.mxu0 0.0
    %967 = vmatpush1.msra.mxu0 0.0
    %968 = vmatprep.subr.mxu0 0.0
    %969 = vmatpush1.msra.mxu0 0.0
    %970 = vmatprep.mubr.f32.mxu0 0.0
    %971 = vmatmul.mubr.f32.gmra.mrb[0].mxu0 %v904
    %v972 = vpop.f32.mrb[0].mxu0
    %v973 = vadd.f32 0.0, %v972
    %v974 = vpop.f32.mrb[0].mxu0
    %v975 = vadd.f32 0.0, %v974
    %976 = vdwg.mxu0
    %977 = vmatprep.subr.mxu0 %v283
    %978 = vmatpush1.msra.mxu0 %v282
    %979 = vmatprep.subr.mxu0 %v287
    %980 = vmatpush1.msra.mxu0 %v286
    %981 = vmatprep.subr.mxu0 %v291
    %982 = vmatpush1.msra.mxu0 %v290
    %983 = vmatprep.subr.mxu0 %v295
    %984 = vmatpush1.msra.mxu0 %v294
    %985 = vmatprep.subr.mxu0 %v299
    %986 = vmatpush1.msra.mxu0 %v298
    %987 = vmatprep.subr.mxu0 %v303
    %988 = vmatpush1.msra.mxu0 %v302
    %989 = vmatprep.subr.mxu0 %v307
    %990 = vmatpush1.msra.mxu0 %v306
    %991 = vmatprep.subr.mxu0 %v311
    %992 = vmatpush1.msra.mxu0 %v310
    %993 = vmatprep.subr.mxu0 %v315
    %994 = vmatpush1.msra.mxu0 %v314
    %995 = vmatprep.subr.mxu0 %v319
    %996 = vmatpush1.msra.mxu0 %v318
    %997 = vmatprep.subr.mxu0 %v323
    %998 = vmatpush1.msra.mxu0 %v322
    %999 = vmatprep.subr.mxu0 %v327
    %1000 = vmatpush1.msra.mxu0 %v326
    %1001 = vmatprep.subr.mxu0 %v331
    %1002 = vmatpush1.msra.mxu0 %v330
    %1003 = vmatprep.subr.mxu0 %v335
    %1004 = vmatpush1.msra.mxu0 %v334
    %1005 = vmatprep.subr.mxu0 %v339
    %1006 = vmatpush1.msra.mxu0 %v338
    %1007 = vmatprep.subr.mxu0 %v343
    %1008 = vmatpush1.msra.mxu0 %v342
    %1009 = vmatprep.subr.mxu0 0.0
    %1010 = vmatpush1.msra.mxu0 0.0
    %1011 = vmatprep.subr.mxu0 0.0
    %1012 = vmatpush1.msra.mxu0 0.0
    %1013 = vmatprep.subr.mxu0 0.0
    %1014 = vmatpush1.msra.mxu0 0.0
    %1015 = vmatprep.subr.mxu0 0.0
    %1016 = vmatpush1.msra.mxu0 0.0
    %1017 = vmatprep.subr.mxu0 0.0
    %1018 = vmatpush1.msra.mxu0 0.0
    %1019 = vmatprep.subr.mxu0 0.0
    %1020 = vmatpush1.msra.mxu0 0.0
    %1021 = vmatprep.subr.mxu0 0.0
    %1022 = vmatpush1.msra.mxu0 0.0
    %1023 = vmatprep.subr.mxu0 0.0
    %1024 = vmatpush1.msra.mxu0 0.0
    %1025 = vmatprep.subr.mxu0 0.0
    %1026 = vmatpush1.msra.mxu0 0.0
    %1027 = vmatprep.subr.mxu0 0.0
    %1028 = vmatpush1.msra.mxu0 0.0
    %1029 = vmatprep.subr.mxu0 0.0
    %1030 = vmatpush1.msra.mxu0 0.0
    %1031 = vmatprep.subr.mxu0 0.0
    %1032 = vmatpush1.msra.mxu0 0.0
    %1033 = vmatprep.subr.mxu0 0.0
    %1034 = vmatpush1.msra.mxu0 0.0
    %1035 = vmatprep.subr.mxu0 0.0
    %1036 = vmatpush1.msra.mxu0 0.0
    %1037 = vmatprep.subr.mxu0 0.0
    %1038 = vmatpush1.msra.mxu0 0.0
    %1039 = vmatprep.subr.mxu0 0.0
    %1040 = vmatpush1.msra.mxu0 0.0
    %1041 = vmatprep.mubr.f32.mxu0 0.0
    %1042 = vmatmul.mubr.f32.gmra.mrb[0].mxu0 %v904
    %v1043 = vpop.f32.mrb[0].mxu0
    %v1044 = vadd.f32 0.0, %v1043
    %v1045 = vpop.f32.mrb[0].mxu0
    %v1046 = vadd.f32 0.0, %v1045
    %1047 = vdwg.mxu0
    %v1052 = vrot.slane %v973, 2
    %v1053 = vrot.slane %v975, 2
    %v1054 = vrot.slane %v1044, 2
    %v1055 = vrot.slane %v1046, 2
    %v1060 = vadd.f32 %v899, %v1052
    %v1061 = vadd.f32 %v900, %v1053
    %v1062 = vadd.f32 %v901, %v1054
    %v1063 = vadd.f32 %v902, %v1055
    %v1064 = vxor.u32 %v1060, 2147483648
    %v1065 = vmul.f32 %v1064, 1.442695
    %v1066 = vpow.pop %v1065
    %v1067 = vadd.f32 %v1066, 1.0
    %v1068 = vrcp.pop %v1067
    %v1069 = vmul.f32 1.0, %v1068
    %v1070 = vxor.u32 %v1061, 2147483648
    %v1071 = vmul.f32 %v1070, 1.442695
    %v1072 = vpow.pop %v1071
    %v1073 = vadd.f32 %v1072, 1.0
    %v1074 = vrcp.pop %v1073
    %v1075 = vmul.f32 1.0, %v1074
    %v1076 = vtanh.pop %v1062
    %v1077 = vxor.u32 %v1063, 2147483648
    %v1078 = vmul.f32 %v1077, 1.442695
    %v1079 = vpow.pop %v1078
    %v1080 = vadd.f32 %v1079, 1.0
    %v1081 = vrcp.pop %v1080
    %v1082 = vmul.f32 1.0, %v1081
    %v1084 = vrot.slane %v896, 6
    %v1086 = vmul.f32 %v1075, %v1084
    %v1087 = vmul.f32 %v1069, %v1076
    %v1088 = vadd.f32 %v1086, %v1087
    %v1089 = vtanh.pop %v1088
    %v1090 = vmul.f32 %v1082, %v1089
    %v1091 = vld [vmem:[#allocation2 + $0x20] sm:$0x3]
    %v1092 = vld [vmem:[#allocation2 + $0x28] sm:$0x3]
    %v1093 = vld [vmem:[#allocation2 + $0x30] sm:$0x3]
    %v1094 = vld [vmem:[#allocation2 + $0x38] sm:$0x3]
    %v1096 = vrot.slane %v1090, 6
    %1098 = vmatprep.subr.mxu0 %v281
    %1099 = vmatpush1.msra.mxu0 %v280
    %1100 = vmatprep.subr.mxu0 %v285
    %1101 = vmatpush1.msra.mxu0 %v284
    %1102 = vmatprep.subr.mxu0 %v289
    %1103 = vmatpush1.msra.mxu0 %v288
    %1104 = vmatprep.subr.mxu0 %v293
    %1105 = vmatpush1.msra.mxu0 %v292
    %1106 = vmatprep.subr.mxu0 %v297
    %1107 = vmatpush1.msra.mxu0 %v296
    %1108 = vmatprep.subr.mxu0 %v301
    %1109 = vmatpush1.msra.mxu0 %v300
    %1110 = vmatprep.subr.mxu0 %v305
    %1111 = vmatpush1.msra.mxu0 %v304
    %1112 = vmatprep.subr.mxu0 %v309
    %1113 = vmatpush1.msra.mxu0 %v308
    %1114 = vmatprep.subr.mxu0 %v313
    %1115 = vmatpush1.msra.mxu0 %v312
    %1116 = vmatprep.subr.mxu0 %v317
    %1117 = vmatpush1.msra.mxu0 %v316
    %1118 = vmatprep.subr.mxu0 %v321
    %1119 = vmatpush1.msra.mxu0 %v320
    %1120 = vmatprep.subr.mxu0 %v325
    %1121 = vmatpush1.msra.mxu0 %v324
    %1122 = vmatprep.subr.mxu0 %v329
    %1123 = vmatpush1.msra.mxu0 %v328
    %1124 = vmatprep.subr.mxu0 %v333
    %1125 = vmatpush1.msra.mxu0 %v332
    %1126 = vmatprep.subr.mxu0 %v337
    %1127 = vmatpush1.msra.mxu0 %v336
    %1128 = vmatprep.subr.mxu0 %v341
    %1129 = vmatpush1.msra.mxu0 %v340
    %1130 = vmatprep.subr.mxu0 0.0
    %1131 = vmatpush1.msra.mxu0 0.0
    %1132 = vmatprep.subr.mxu0 0.0
    %1133 = vmatpush1.msra.mxu0 0.0
    %1134 = vmatprep.subr.mxu0 0.0
    %1135 = vmatpush1.msra.mxu0 0.0
    %1136 = vmatprep.subr.mxu0 0.0
    %1137 = vmatpush1.msra.mxu0 0.0
    %1138 = vmatprep.subr.mxu0 0.0
    %1139 = vmatpush1.msra.mxu0 0.0
    %1140 = vmatprep.subr.mxu0 0.0
    %1141 = vmatpush1.msra.mxu0 0.0
    %1142 = vmatprep.subr.mxu0 0.0
    %1143 = vmatpush1.msra.mxu0 0.0
    %1144 = vmatprep.subr.mxu0 0.0
    %1145 = vmatpush1.msra.mxu0 0.0
    %1146 = vmatprep.subr.mxu0 0.0
    %1147 = vmatpush1.msra.mxu0 0.0
    %1148 = vmatprep.subr.mxu0 0.0
    %1149 = vmatpush1.msra.mxu0 0.0
    %1150 = vmatprep.subr.mxu0 0.0
    %1151 = vmatpush1.msra.mxu0 0.0
    %1152 = vmatprep.subr.mxu0 0.0
    %1153 = vmatpush1.msra.mxu0 0.0
    %1154 = vmatprep.subr.mxu0 0.0
    %1155 = vmatpush1.msra.mxu0 0.0
    %1156 = vmatprep.subr.mxu0 0.0
    %1157 = vmatpush1.msra.mxu0 0.0
    %1158 = vmatprep.subr.mxu0 0.0
    %1159 = vmatpush1.msra.mxu0 0.0
    %1160 = vmatprep.subr.mxu0 0.0
    %1161 = vmatpush1.msra.mxu0 0.0
    %1162 = vmatprep.mubr.f32.mxu0 0.0
    %1163 = vmatmul.mubr.f32.gmra.mrb[0].mxu0 %v1096
    %v1164 = vpop.f32.mrb[0].mxu0
    %v1165 = vadd.f32 0.0, %v1164
    %v1166 = vpop.f32.mrb[0].mxu0
    %v1167 = vadd.f32 0.0, %v1166
    %1168 = vdwg.mxu0
    %1169 = vmatprep.subr.mxu0 %v283
    %1170 = vmatpush1.msra.mxu0 %v282
    %1171 = vmatprep.subr.mxu0 %v287
    %1172 = vmatpush1.msra.mxu0 %v286
    %1173 = vmatprep.subr.mxu0 %v291
    %1174 = vmatpush1.msra.mxu0 %v290
    %1175 = vmatprep.subr.mxu0 %v295
    %1176 = vmatpush1.msra.mxu0 %v294
    %1177 = vmatprep.subr.mxu0 %v299
    %1178 = vmatpush1.msra.mxu0 %v298
    %1179 = vmatprep.subr.mxu0 %v303
    %1180 = vmatpush1.msra.mxu0 %v302
    %1181 = vmatprep.subr.mxu0 %v307
    %1182 = vmatpush1.msra.mxu0 %v306
    %1183 = vmatprep.subr.mxu0 %v311
    %1184 = vmatpush1.msra.mxu0 %v310
    %1185 = vmatprep.subr.mxu0 %v315
    %1186 = vmatpush1.msra.mxu0 %v314
    %1187 = vmatprep.subr.mxu0 %v319
    %1188 = vmatpush1.msra.mxu0 %v318
    %1189 = vmatprep.subr.mxu0 %v323
    %1190 = vmatpush1.msra.mxu0 %v322
    %1191 = vmatprep.subr.mxu0 %v327
    %1192 = vmatpush1.msra.mxu0 %v326
    %1193 = vmatprep.subr.mxu0 %v331
    %1194 = vmatpush1.msra.mxu0 %v330
    %1195 = vmatprep.subr.mxu0 %v335
    %1196 = vmatpush1.msra.mxu0 %v334
    %1197 = vmatprep.subr.mxu0 %v339
    %1198 = vmatpush1.msra.mxu0 %v338
    %1199 = vmatprep.subr.mxu0 %v343
    %1200 = vmatpush1.msra.mxu0 %v342
    %1201 = vmatprep.subr.mxu0 0.0
    %1202 = vmatpush1.msra.mxu0 0.0
    %1203 = vmatprep.subr.mxu0 0.0
    %1204 = vmatpush1.msra.mxu0 0.0
    %1205 = vmatprep.subr.mxu0 0.0
    %1206 = vmatpush1.msra.mxu0 0.0
    %1207 = vmatprep.subr.mxu0 0.0
    %1208 = vmatpush1.msra.mxu0 0.0
    %1209 = vmatprep.subr.mxu0 0.0
    %1210 = vmatpush1.msra.mxu0 0.0
    %1211 = vmatprep.subr.mxu0 0.0
    %1212 = vmatpush1.msra.mxu0 0.0
    %1213 = vmatprep.subr.mxu0 0.0
    %1214 = vmatpush1.msra.mxu0 0.0
    %1215 = vmatprep.subr.mxu0 0.0
    %1216 = vmatpush1.msra.mxu0 0.0
    %1217 = vmatprep.subr.mxu0 0.0
    %1218 = vmatpush1.msra.mxu0 0.0
    %1219 = vmatprep.subr.mxu0 0.0
    %1220 = vmatpush1.msra.mxu0 0.0
    %1221 = vmatprep.subr.mxu0 0.0
    %1222 = vmatpush1.msra.mxu0 0.0
    %1223 = vmatprep.subr.mxu0 0.0
    %1224 = vmatpush1.msra.mxu0 0.0
    %1225 = vmatprep.subr.mxu0 0.0
    %1226 = vmatpush1.msra.mxu0 0.0
    %1227 = vmatprep.subr.mxu0 0.0
    %1228 = vmatpush1.msra.mxu0 0.0
    %1229 = vmatprep.subr.mxu0 0.0
    %1230 = vmatpush1.msra.mxu0 0.0
    %1231 = vmatprep.subr.mxu0 0.0
    %1232 = vmatpush1.msra.mxu0 0.0
    %1233 = vmatprep.mubr.f32.mxu0 0.0
    %1234 = vmatmul.mubr.f32.gmra.mrb[0].mxu0 %v1096
    %v1235 = vpop.f32.mrb[0].mxu0
    %v1236 = vadd.f32 0.0, %v1235
    %v1237 = vpop.f32.mrb[0].mxu0
    %v1238 = vadd.f32 0.0, %v1237
    %1239 = vdwg.mxu0
    %v1240 = vadd.f32 %v1091, %v1165
    %v1241 = vadd.f32 %v1092, %v1167
    %v1242 = vadd.f32 %v1093, %v1236
    %v1243 = vadd.f32 %v1094, %v1238
    %v1244 = vxor.u32 %v1240, 2147483648
    %v1245 = vmul.f32 %v1244, 1.442695
    %v1246 = vpow.pop %v1245
    %v1247 = vadd.f32 %v1246, 1.0
    %v1248 = vrcp.pop %v1247
    %v1249 = vmul.f32 1.0, %v1248
    %v1250 = vxor.u32 %v1241, 2147483648
    %v1251 = vmul.f32 %v1250, 1.442695
    %v1252 = vpow.pop %v1251
    %v1253 = vadd.f32 %v1252, 1.0
    %v1254 = vrcp.pop %v1253
    %v1255 = vmul.f32 1.0, %v1254
    %v1256 = vtanh.pop %v1242
    %v1257 = vxor.u32 %v1243, 2147483648
    %v1258 = vmul.f32 %v1257, 1.442695
    %v1259 = vpow.pop %v1258
    %v1260 = vadd.f32 %v1259, 1.0
    %v1261 = vrcp.pop %v1260
    %v1262 = vmul.f32 1.0, %v1261
    %v1264 = vrot.slane %v1088, 6
    %v1266 = vmul.f32 %v1255, %v1264
    %v1267 = vmul.f32 %v1249, %v1256
    %v1268 = vadd.f32 %v1266, %v1267
    %v1269 = vtanh.pop %v1268
    %v1270 = vmul.f32 %v1262, %v1269
    %v1271 = vld [vmem:[#allocation2 + $0x20] sm:$0xc]
    %v1272 = vld [vmem:[#allocation2 + $0x28] sm:$0xc]
    %v1273 = vld [vmem:[#allocation2 + $0x30] sm:$0xc]
    %v1274 = vld [vmem:[#allocation2 + $0x38] sm:$0xc]
    %1275 = vmatprep.subr.mxu0 %v281
    %1276 = vmatpush1.msra.mxu0 %v280
    %1277 = vmatprep.subr.mxu0 %v285
    %1278 = vmatpush1.msra.mxu0 %v284
    %1279 = vmatprep.subr.mxu0 %v289
    %1280 = vmatpush1.msra.mxu0 %v288
    %1281 = vmatprep.subr.mxu0 %v293
    %1282 = vmatpush1.msra.mxu0 %v292
    %1283 = vmatprep.subr.mxu0 %v297
    %1284 = vmatpush1.msra.mxu0 %v296
    %1285 = vmatprep.subr.mxu0 %v301
    %1286 = vmatpush1.msra.mxu0 %v300
    %1287 = vmatprep.subr.mxu0 %v305
    %1288 = vmatpush1.msra.mxu0 %v304
    %1289 = vmatprep.subr.mxu0 %v309
    %1290 = vmatpush1.msra.mxu0 %v308
    %1291 = vmatprep.subr.mxu0 %v313
    %1292 = vmatpush1.msra.mxu0 %v312
    %1293 = vmatprep.subr.mxu0 %v317
    %1294 = vmatpush1.msra.mxu0 %v316
    %1295 = vmatprep.subr.mxu0 %v321
    %1296 = vmatpush1.msra.mxu0 %v320
    %1297 = vmatprep.subr.mxu0 %v325
    %1298 = vmatpush1.msra.mxu0 %v324
    %1299 = vmatprep.subr.mxu0 %v329
    %1300 = vmatpush1.msra.mxu0 %v328
    %1301 = vmatprep.subr.mxu0 %v333
    %1302 = vmatpush1.msra.mxu0 %v332
    %1303 = vmatprep.subr.mxu0 %v337
    %1304 = vmatpush1.msra.mxu0 %v336
    %1305 = vmatprep.subr.mxu0 %v341
    %1306 = vmatpush1.msra.mxu0 %v340
    %1307 = vmatprep.subr.mxu0 0.0
    %1308 = vmatpush1.msra.mxu0 0.0
    %1309 = vmatprep.subr.mxu0 0.0
    %1310 = vmatpush1.msra.mxu0 0.0
    %1311 = vmatprep.subr.mxu0 0.0
    %1312 = vmatpush1.msra.mxu0 0.0
    %1313 = vmatprep.subr.mxu0 0.0
    %1314 = vmatpush1.msra.mxu0 0.0
    %1315 = vmatprep.subr.mxu0 0.0
    %1316 = vmatpush1.msra.mxu0 0.0
    %1317 = vmatprep.subr.mxu0 0.0
    %1318 = vmatpush1.msra.mxu0 0.0
    %1319 = vmatprep.subr.mxu0 0.0
    %1320 = vmatpush1.msra.mxu0 0.0
    %1321 = vmatprep.subr.mxu0 0.0
    %1322 = vmatpush1.msra.mxu0 0.0
    %1323 = vmatprep.subr.mxu0 0.0
    %1324 = vmatpush1.msra.mxu0 0.0
    %1325 = vmatprep.subr.mxu0 0.0
    %1326 = vmatpush1.msra.mxu0 0.0
    %1327 = vmatprep.subr.mxu0 0.0
    %1328 = vmatpush1.msra.mxu0 0.0
    %1329 = vmatprep.subr.mxu0 0.0
    %1330 = vmatpush1.msra.mxu0 0.0
    %1331 = vmatprep.subr.mxu0 0.0
    %1332 = vmatpush1.msra.mxu0 0.0
    %1333 = vmatprep.subr.mxu0 0.0
    %1334 = vmatpush1.msra.mxu0 0.0
    %1335 = vmatprep.subr.mxu0 0.0
    %1336 = vmatpush1.msra.mxu0 0.0
    %1337 = vmatprep.subr.mxu0 0.0
    %1338 = vmatpush1.msra.mxu0 0.0
    %1339 = vmatprep.mubr.f32.mxu0 0.0
    %1340 = vmatmul.mubr.f32.gmra.mrb[0].mxu0 %v1270
    %v1341 = vpop.f32.mrb[0].mxu0
    %v1342 = vadd.f32 0.0, %v1341
    %v1343 = vpop.f32.mrb[0].mxu0
    %v1344 = vadd.f32 0.0, %v1343
    %1345 = vdwg.mxu0
    %1346 = vmatprep.subr.mxu0 %v283
    %1347 = vmatpush1.msra.mxu0 %v282
    %1348 = vmatprep.subr.mxu0 %v287
    %1349 = vmatpush1.msra.mxu0 %v286
    %1350 = vmatprep.subr.mxu0 %v291
    %1351 = vmatpush1.msra.mxu0 %v290
    %1352 = vmatprep.subr.mxu0 %v295
    %1353 = vmatpush1.msra.mxu0 %v294
    %1354 = vmatprep.subr.mxu0 %v299
    %1355 = vmatpush1.msra.mxu0 %v298
    %1356 = vmatprep.subr.mxu0 %v303
    %1357 = vmatpush1.msra.mxu0 %v302
    %1358 = vmatprep.subr.mxu0 %v307
    %1359 = vmatpush1.msra.mxu0 %v306
    %1360 = vmatprep.subr.mxu0 %v311
    %1361 = vmatpush1.msra.mxu0 %v310
    %1362 = vmatprep.subr.mxu0 %v315
    %1363 = vmatpush1.msra.mxu0 %v314
    %1364 = vmatprep.subr.mxu0 %v319
    %1365 = vmatpush1.msra.mxu0 %v318
    %1366 = vmatprep.subr.mxu0 %v323
    %1367 = vmatpush1.msra.mxu0 %v322
    %1368 = vmatprep.subr.mxu0 %v327
    %1369 = vmatpush1.msra.mxu0 %v326
    %1370 = vmatprep.subr.mxu0 %v331
    %1371 = vmatpush1.msra.mxu0 %v330
    %1372 = vmatprep.subr.mxu0 %v335
    %1373 = vmatpush1.msra.mxu0 %v334
    %1374 = vmatprep.subr.mxu0 %v339
    %1375 = vmatpush1.msra.mxu0 %v338
    %1376 = vmatprep.subr.mxu0 %v343
    %1377 = vmatpush1.msra.mxu0 %v342
    %1378 = vmatprep.subr.mxu0 0.0
    %1379 = vmatpush1.msra.mxu0 0.0
    %1380 = vmatprep.subr.mxu0 0.0
    %1381 = vmatpush1.msra.mxu0 0.0
    %1382 = vmatprep.subr.mxu0 0.0
    %1383 = vmatpush1.msra.mxu0 0.0
    %1384 = vmatprep.subr.mxu0 0.0
    %1385 = vmatpush1.msra.mxu0 0.0
    %1386 = vmatprep.subr.mxu0 0.0
    %1387 = vmatpush1.msra.mxu0 0.0
    %1388 = vmatprep.subr.mxu0 0.0
    %1389 = vmatpush1.msra.mxu0 0.0
    %1390 = vmatprep.subr.mxu0 0.0
    %1391 = vmatpush1.msra.mxu0 0.0
    %1392 = vmatprep.subr.mxu0 0.0
    %1393 = vmatpush1.msra.mxu0 0.0
    %1394 = vmatprep.subr.mxu0 0.0
    %1395 = vmatpush1.msra.mxu0 0.0
    %1396 = vmatprep.subr.mxu0 0.0
    %1397 = vmatpush1.msra.mxu0 0.0
    %1398 = vmatprep.subr.mxu0 0.0
    %1399 = vmatpush1.msra.mxu0 0.0
    %1400 = vmatprep.subr.mxu0 0.0
    %1401 = vmatpush1.msra.mxu0 0.0
    %1402 = vmatprep.subr.mxu0 0.0
    %1403 = vmatpush1.msra.mxu0 0.0
    %1404 = vmatprep.subr.mxu0 0.0
    %1405 = vmatpush1.msra.mxu0 0.0
    %1406 = vmatprep.subr.mxu0 0.0
    %1407 = vmatpush1.msra.mxu0 0.0
    %1408 = vmatprep.subr.mxu0 0.0
    %1409 = vmatpush1.msra.mxu0 0.0
    %1410 = vmatprep.mubr.f32.mxu0 0.0
    %1411 = vmatmul.mubr.f32.gmra.mrb[0].mxu0 %v1270
    %v1412 = vpop.f32.mrb[0].mxu0
    %v1413 = vadd.f32 0.0, %v1412
    %v1414 = vpop.f32.mrb[0].mxu0
    %v1415 = vadd.f32 0.0, %v1414
    %1416 = vdwg.mxu0
    %v1421 = vrot.slane %v1342, 6
    %v1422 = vrot.slane %v1344, 6
    %v1423 = vrot.slane %v1413, 6
    %v1424 = vrot.slane %v1415, 6
    %v1429 = vadd.f32 %v1271, %v1421
    %v1430 = vadd.f32 %v1272, %v1422
    %v1431 = vadd.f32 %v1273, %v1423
    %v1432 = vadd.f32 %v1274, %v1424
    %v1433 = vxor.u32 %v1429, 2147483648
    %v1434 = vmul.f32 %v1433, 1.442695
    %v1435 = vpow.pop %v1434
    %v1436 = vadd.f32 %v1435, 1.0
    %v1437 = vrcp.pop %v1436
    %v1438 = vmul.f32 1.0, %v1437
    %v1439 = vxor.u32 %v1430, 2147483648
    %v1440 = vmul.f32 %v1439, 1.442695
    %v1441 = vpow.pop %v1440
    %v1442 = vadd.f32 %v1441, 1.0
    %v1443 = vrcp.pop %v1442
    %v1444 = vmul.f32 1.0, %v1443
    %v1445 = vtanh.pop %v1431
    %v1446 = vxor.u32 %v1432, 2147483648
    %v1447 = vmul.f32 %v1446, 1.442695
    %v1448 = vpow.pop %v1447
    %v1449 = vadd.f32 %v1448, 1.0
    %v1450 = vrcp.pop %v1449
    %v1451 = vmul.f32 1.0, %v1450
    %v1453 = vrot.slane %v1268, 6
    %v1455 = vmul.f32 %v1444, %v1453
    %v1456 = vmul.f32 %v1438, %v1445
    %v1457 = vadd.f32 %v1455, %v1456
    %v1458 = vtanh.pop %v1457
    %v1459 = vmul.f32 %v1451, %v1458
    %v1460 = vld [vmem:[#allocation2 + $0x20] sm:$0x30]
    %v1461 = vld [vmem:[#allocation2 + $0x28] sm:$0x30]
    %v1462 = vld [vmem:[#allocation2 + $0x30] sm:$0x30]
    %v1463 = vld [vmem:[#allocation2 + $0x38] sm:$0x30]
    %v1465 = vrot.slane %v1459, 2
    %1467 = vmatprep.subr.mxu0 %v281
    %1468 = vmatpush1.msra.mxu0 %v280
    %1469 = vmatprep.subr.mxu0 %v285
    %1470 = vmatpush1.msra.mxu0 %v284
    %1471 = vmatprep.subr.mxu0 %v289
    %1472 = vmatpush1.msra.mxu0 %v288
    %1473 = vmatprep.subr.mxu0 %v293
    %1474 = vmatpush1.msra.mxu0 %v292
    %1475 = vmatprep.subr.mxu0 %v297
    %1476 = vmatpush1.msra.mxu0 %v296
    %1477 = vmatprep.subr.mxu0 %v301
    %1478 = vmatpush1.msra.mxu0 %v300
    %1479 = vmatprep.subr.mxu0 %v305
    %1480 = vmatpush1.msra.mxu0 %v304
    %1481 = vmatprep.subr.mxu0 %v309
    %1482 = vmatpush1.msra.mxu0 %v308
    %1483 = vmatprep.subr.mxu0 %v313
    %1484 = vmatpush1.msra.mxu0 %v312
    %1485 = vmatprep.subr.mxu0 %v317
    %1486 = vmatpush1.msra.mxu0 %v316
    %1487 = vmatprep.subr.mxu0 %v321
    %1488 = vmatpush1.msra.mxu0 %v320
    %1489 = vmatprep.subr.mxu0 %v325
    %1490 = vmatpush1.msra.mxu0 %v324
    %1491 = vmatprep.subr.mxu0 %v329
    %1492 = vmatpush1.msra.mxu0 %v328
    %1493 = vmatprep.subr.mxu0 %v333
    %1494 = vmatpush1.msra.mxu0 %v332
    %1495 = vmatprep.subr.mxu0 %v337
    %1496 = vmatpush1.msra.mxu0 %v336
    %1497 = vmatprep.subr.mxu0 %v341
    %1498 = vmatpush1.msra.mxu0 %v340
    %1499 = vmatprep.subr.mxu0 0.0
    %1500 = vmatpush1.msra.mxu0 0.0
    %1501 = vmatprep.subr.mxu0 0.0
    %1502 = vmatpush1.msra.mxu0 0.0
    %1503 = vmatprep.subr.mxu0 0.0
    %1504 = vmatpush1.msra.mxu0 0.0
    %1505 = vmatprep.subr.mxu0 0.0
    %1506 = vmatpush1.msra.mxu0 0.0
    %1507 = vmatprep.subr.mxu0 0.0
    %1508 = vmatpush1.msra.mxu0 0.0
    %1509 = vmatprep.subr.mxu0 0.0
    %1510 = vmatpush1.msra.mxu0 0.0
    %1511 = vmatprep.subr.mxu0 0.0
    %1512 = vmatpush1.msra.mxu0 0.0
    %1513 = vmatprep.subr.mxu0 0.0
    %1514 = vmatpush1.msra.mxu0 0.0
    %1515 = vmatprep.subr.mxu0 0.0
    %1516 = vmatpush1.msra.mxu0 0.0
    %1517 = vmatprep.subr.mxu0 0.0
    %1518 = vmatpush1.msra.mxu0 0.0
    %1519 = vmatprep.subr.mxu0 0.0
    %1520 = vmatpush1.msra.mxu0 0.0
    %1521 = vmatprep.subr.mxu0 0.0
    %1522 = vmatpush1.msra.mxu0 0.0
    %1523 = vmatprep.subr.mxu0 0.0
    %1524 = vmatpush1.msra.mxu0 0.0
    %1525 = vmatprep.subr.mxu0 0.0
    %1526 = vmatpush1.msra.mxu0 0.0
    %1527 = vmatprep.subr.mxu0 0.0
    %1528 = vmatpush1.msra.mxu0 0.0
    %1529 = vmatprep.subr.mxu0 0.0
    %1530 = vmatpush1.msra.mxu0 0.0
    %1531 = vmatprep.mubr.f32.mxu0 0.0
    %1532 = vmatmul.mubr.f32.gmra.mrb[0].mxu0 %v1465
    %v1533 = vpop.f32.mrb[0].mxu0
    %v1534 = vadd.f32 0.0, %v1533
    %v1535 = vpop.f32.mrb[0].mxu0
    %v1536 = vadd.f32 0.0, %v1535
    %1537 = vdwg.mxu0
    %1538 = vmatprep.subr.mxu0 %v283
    %1539 = vmatpush1.msra.mxu0 %v282
    %1540 = vmatprep.subr.mxu0 %v287
    %1541 = vmatpush1.msra.mxu0 %v286
    %1542 = vmatprep.subr.mxu0 %v291
    %1543 = vmatpush1.msra.mxu0 %v290
    %1544 = vmatprep.subr.mxu0 %v295
    %1545 = vmatpush1.msra.mxu0 %v294
    %1546 = vmatprep.subr.mxu0 %v299
    %1547 = vmatpush1.msra.mxu0 %v298
    %1548 = vmatprep.subr.mxu0 %v303
    %1549 = vmatpush1.msra.mxu0 %v302
    %1550 = vmatprep.subr.mxu0 %v307
    %1551 = vmatpush1.msra.mxu0 %v306
    %1552 = vmatprep.subr.mxu0 %v311
    %1553 = vmatpush1.msra.mxu0 %v310
    %1554 = vmatprep.subr.mxu0 %v315
    %1555 = vmatpush1.msra.mxu0 %v314
    %1556 = vmatprep.subr.mxu0 %v319
    %1557 = vmatpush1.msra.mxu0 %v318
    %1558 = vmatprep.subr.mxu0 %v323
    %1559 = vmatpush1.msra.mxu0 %v322
    %1560 = vmatprep.subr.mxu0 %v327
    %1561 = vmatpush1.msra.mxu0 %v326
    %1562 = vmatprep.subr.mxu0 %v331
    %1563 = vmatpush1.msra.mxu0 %v330
    %1564 = vmatprep.subr.mxu0 %v335
    %1565 = vmatpush1.msra.mxu0 %v334
    %1566 = vmatprep.subr.mxu0 %v339
    %1567 = vmatpush1.msra.mxu0 %v338
    %1568 = vmatprep.subr.mxu0 %v343
    %1569 = vmatpush1.msra.mxu0 %v342
    %1570 = vmatprep.subr.mxu0 0.0
    %1571 = vmatpush1.msra.mxu0 0.0
    %1572 = vmatprep.subr.mxu0 0.0
    %1573 = vmatpush1.msra.mxu0 0.0
    %1574 = vmatprep.subr.mxu0 0.0
    %1575 = vmatpush1.msra.mxu0 0.0
    %1576 = vmatprep.subr.mxu0 0.0
    %1577 = vmatpush1.msra.mxu0 0.0
    %1578 = vmatprep.subr.mxu0 0.0
    %1579 = vmatpush1.msra.mxu0 0.0
    %1580 = vmatprep.subr.mxu0 0.0
    %1581 = vmatpush1.msra.mxu0 0.0
    %1582 = vmatprep.subr.mxu0 0.0
    %1583 = vmatpush1.msra.mxu0 0.0
    %1584 = vmatprep.subr.mxu0 0.0
    %1585 = vmatpush1.msra.mxu0 0.0
    %1586 = vmatprep.subr.mxu0 0.0
    %1587 = vmatpush1.msra.mxu0 0.0
    %1588 = vmatprep.subr.mxu0 0.0
    %1589 = vmatpush1.msra.mxu0 0.0
    %1590 = vmatprep.subr.mxu0 0.0
    %1591 = vmatpush1.msra.mxu0 0.0
    %1592 = vmatprep.subr.mxu0 0.0
    %1593 = vmatpush1.msra.mxu0 0.0
    %1594 = vmatprep.subr.mxu0 0.0
    %1595 = vmatpush1.msra.mxu0 0.0
    %1596 = vmatprep.subr.mxu0 0.0
    %1597 = vmatpush1.msra.mxu0 0.0
    %1598 = vmatprep.subr.mxu0 0.0
    %1599 = vmatpush1.msra.mxu0 0.0
    %1600 = vmatprep.subr.mxu0 0.0
    %1601 = vmatpush1.msra.mxu0 0.0
    %1602 = vmatprep.mubr.f32.mxu0 0.0
    %1603 = vmatmul.mubr.f32.gmra.mrb[0].mxu0 %v1465
    %v1604 = vpop.f32.mrb[0].mxu0
    %v1605 = vadd.f32 0.0, %v1604
    %v1606 = vpop.f32.mrb[0].mxu0
    %v1607 = vadd.f32 0.0, %v1606
    %1608 = vdwg.mxu0
    %v1613 = vrot.slane %v1534, 4
    %v1614 = vrot.slane %v1536, 4
    %v1615 = vrot.slane %v1605, 4
    %v1616 = vrot.slane %v1607, 4
    %v1621 = vadd.f32 %v1460, %v1613
    %v1622 = vadd.f32 %v1461, %v1614
    %v1623 = vadd.f32 %v1462, %v1615
    %v1624 = vadd.f32 %v1463, %v1616
    %v1625 = vxor.u32 %v1621, 2147483648
    %v1626 = vmul.f32 %v1625, 1.442695
    %v1627 = vpow.pop %v1626
    %v1628 = vadd.f32 %v1627, 1.0
    %v1629 = vrcp.pop %v1628
    %v1630 = vmul.f32 1.0, %v1629
    %v1631 = vxor.u32 %v1622, 2147483648
    %v1632 = vmul.f32 %v1631, 1.442695
    %v1633 = vpow.pop %v1632
    %v1634 = vadd.f32 %v1633, 1.0
    %v1635 = vrcp.pop %v1634
    %v1636 = vmul.f32 1.0, %v1635
    %v1637 = vtanh.pop %v1623
    %v1638 = vxor.u32 %v1624, 2147483648
    %v1639 = vmul.f32 %v1638, 1.442695
    %v1640 = vpow.pop %v1639
    %v1641 = vadd.f32 %v1640, 1.0
    %v1642 = vrcp.pop %v1641
    %v1643 = vmul.f32 1.0, %v1642
    %v1645 = vrot.slane %v1457, 6
    %v1647 = vmul.f32 %v1636, %v1645
    %v1648 = vmul.f32 %v1630, %v1637
    %v1649 = vadd.f32 %v1647, %v1648
    %v1650 = vtanh.pop %v1649
    %v1651 = vmul.f32 %v1643, %v1650
    %v1652 = vld [vmem:[#allocation2 + $0x20] sm:$0xc0]
    %v1653 = vld [vmem:[#allocation2 + $0x28] sm:$0xc0]
    %v1654 = vld [vmem:[#allocation2 + $0x30] sm:$0xc0]
    %v1655 = vld [vmem:[#allocation2 + $0x38] sm:$0xc0]
    %v1657 = vrot.slane %v1651, 4
    %1659 = vmatprep.subr.mxu0 %v281
    %1660 = vmatpush1.msra.mxu0 %v280
    %1661 = vmatprep.subr.mxu0 %v285
    %1662 = vmatpush1.msra.mxu0 %v284
    %1663 = vmatprep.subr.mxu0 %v289
    %1664 = vmatpush1.msra.mxu0 %v288
    %1665 = vmatprep.subr.mxu0 %v293
    %1666 = vmatpush1.msra.mxu0 %v292
    %1667 = vmatprep.subr.mxu0 %v297
    %1668 = vmatpush1.msra.mxu0 %v296
    %1669 = vmatprep.subr.mxu0 %v301
    %1670 = vmatpush1.msra.mxu0 %v300
    %1671 = vmatprep.subr.mxu0 %v305
    %1672 = vmatpush1.msra.mxu0 %v304
    %1673 = vmatprep.subr.mxu0 %v309
    %1674 = vmatpush1.msra.mxu0 %v308
    %1675 = vmatprep.subr.mxu0 %v313
    %1676 = vmatpush1.msra.mxu0 %v312
    %1677 = vmatprep.subr.mxu0 %v317
    %1678 = vmatpush1.msra.mxu0 %v316
    %1679 = vmatprep.subr.mxu0 %v321
    %1680 = vmatpush1.msra.mxu0 %v320
    %1681 = vmatprep.subr.mxu0 %v325
    %1682 = vmatpush1.msra.mxu0 %v324
    %1683 = vmatprep.subr.mxu0 %v329
    %1684 = vmatpush1.msra.mxu0 %v328
    %1685 = vmatprep.subr.mxu0 %v333
    %1686 = vmatpush1.msra.mxu0 %v332
    %1687 = vmatprep.subr.mxu0 %v337
    %1688 = vmatpush1.msra.mxu0 %v336
    %1689 = vmatprep.subr.mxu0 %v341
    %1690 = vmatpush1.msra.mxu0 %v340
    %1691 = vmatprep.subr.mxu0 0.0
    %1692 = vmatpush1.msra.mxu0 0.0
    %1693 = vmatprep.subr.mxu0 0.0
    %1694 = vmatpush1.msra.mxu0 0.0
    %1695 = vmatprep.subr.mxu0 0.0
    %1696 = vmatpush1.msra.mxu0 0.0
    %1697 = vmatprep.subr.mxu0 0.0
    %1698 = vmatpush1.msra.mxu0 0.0
    %1699 = vmatprep.subr.mxu0 0.0
    %1700 = vmatpush1.msra.mxu0 0.0
    %1701 = vmatprep.subr.mxu0 0.0
    %1702 = vmatpush1.msra.mxu0 0.0
    %1703 = vmatprep.subr.mxu0 0.0
    %1704 = vmatpush1.msra.mxu0 0.0
    %1705 = vmatprep.subr.mxu0 0.0
    %1706 = vmatpush1.msra.mxu0 0.0
    %1707 = vmatprep.subr.mxu0 0.0
    %1708 = vmatpush1.msra.mxu0 0.0
    %1709 = vmatprep.subr.mxu0 0.0
    %1710 = vmatpush1.msra.mxu0 0.0
    %1711 = vmatprep.subr.mxu0 0.0
    %1712 = vmatpush1.msra.mxu0 0.0
    %1713 = vmatprep.subr.mxu0 0.0
    %1714 = vmatpush1.msra.mxu0 0.0
    %1715 = vmatprep.subr.mxu0 0.0
    %1716 = vmatpush1.msra.mxu0 0.0
    %1717 = vmatprep.subr.mxu0 0.0
    %1718 = vmatpush1.msra.mxu0 0.0
    %1719 = vmatprep.subr.mxu0 0.0
    %1720 = vmatpush1.msra.mxu0 0.0
    %1721 = vmatprep.subr.mxu0 0.0
    %1722 = vmatpush1.msra.mxu0 0.0
    %1723 = vmatprep.mubr.f32.mxu0 0.0
    %1724 = vmatmul.mubr.f32.gmra.mrb[0].mxu0 %v1657
    %v1725 = vpop.f32.mrb[0].mxu0
    %v1726 = vadd.f32 0.0, %v1725
    %v1727 = vpop.f32.mrb[0].mxu0
    %v1728 = vadd.f32 0.0, %v1727
    %1729 = vdwg.mxu0
    %1730 = vmatprep.subr.mxu0 %v283
    %1731 = vmatpush1.msra.mxu0 %v282
    %1732 = vmatprep.subr.mxu0 %v287
    %1733 = vmatpush1.msra.mxu0 %v286
    %1734 = vmatprep.subr.mxu0 %v291
    %1735 = vmatpush1.msra.mxu0 %v290
    %1736 = vmatprep.subr.mxu0 %v295
    %1737 = vmatpush1.msra.mxu0 %v294
    %1738 = vmatprep.subr.mxu0 %v299
    %1739 = vmatpush1.msra.mxu0 %v298
    %1740 = vmatprep.subr.mxu0 %v303
    %1741 = vmatpush1.msra.mxu0 %v302
    %1742 = vmatprep.subr.mxu0 %v307
    %1743 = vmatpush1.msra.mxu0 %v306
    %1744 = vmatprep.subr.mxu0 %v311
    %1745 = vmatpush1.msra.mxu0 %v310
    %1746 = vmatprep.subr.mxu0 %v315
    %1747 = vmatpush1.msra.mxu0 %v314
    %1748 = vmatprep.subr.mxu0 %v319
    %1749 = vmatpush1.msra.mxu0 %v318
    %1750 = vmatprep.subr.mxu0 %v323
    %1751 = vmatpush1.msra.mxu0 %v322
    %1752 = vmatprep.subr.mxu0 %v327
    %1753 = vmatpush1.msra.mxu0 %v326
    %1754 = vmatprep.subr.mxu0 %v331
    %1755 = vmatpush1.msra.mxu0 %v330
    %1756 = vmatprep.subr.mxu0 %v335
    %1757 = vmatpush1.msra.mxu0 %v334
    %1758 = vmatprep.subr.mxu0 %v339
    %1759 = vmatpush1.msra.mxu0 %v338
    %1760 = vmatprep.subr.mxu0 %v343
    %1761 = vmatpush1.msra.mxu0 %v342
    %1762 = vmatprep.subr.mxu0 0.0
    %1763 = vmatpush1.msra.mxu0 0.0
    %1764 = vmatprep.subr.mxu0 0.0
    %1765 = vmatpush1.msra.mxu0 0.0
    %1766 = vmatprep.subr.mxu0 0.0
    %1767 = vmatpush1.msra.mxu0 0.0
    %1768 = vmatprep.subr.mxu0 0.0
    %1769 = vmatpush1.msra.mxu0 0.0
    %1770 = vmatprep.subr.mxu0 0.0
    %1771 = vmatpush1.msra.mxu0 0.0
    %1772 = vmatprep.subr.mxu0 0.0
    %1773 = vmatpush1.msra.mxu0 0.0
    %1774 = vmatprep.subr.mxu0 0.0
    %1775 = vmatpush1.msra.mxu0 0.0
    %1776 = vmatprep.subr.mxu0 0.0
    %1777 = vmatpush1.msra.mxu0 0.0
    %1778 = vmatprep.subr.mxu0 0.0
    %1779 = vmatpush1.msra.mxu0 0.0
    %1780 = vmatprep.subr.mxu0 0.0
    %1781 = vmatpush1.msra.mxu0 0.0
    %1782 = vmatprep.subr.mxu0 0.0
    %1783 = vmatpush1.msra.mxu0 0.0
    %1784 = vmatprep.subr.mxu0 0.0
    %1785 = vmatpush1.msra.mxu0 0.0
    %1786 = vmatprep.subr.mxu0 0.0
    %1787 = vmatpush1.msra.mxu0 0.0
    %1788 = vmatprep.subr.mxu0 0.0
    %1789 = vmatpush1.msra.mxu0 0.0
    %1790 = vmatprep.subr.mxu0 0.0
    %1791 = vmatpush1.msra.mxu0 0.0
    %1792 = vmatprep.subr.mxu0 0.0
    %1793 = vmatpush1.msra.mxu0 0.0
    %1794 = vmatprep.mubr.f32.mxu0 0.0
    %1795 = vmatmul.mubr.f32.gmra.mrb[0].mxu0 %v1657
    %v1796 = vpop.f32.mrb[0].mxu0
    %v1797 = vadd.f32 0.0, %v1796
    %v1798 = vpop.f32.mrb[0].mxu0
    %v1799 = vadd.f32 0.0, %v1798
    %1800 = vdwg.mxu0
    %v1805 = vrot.slane %v1726, 2
    %v1806 = vrot.slane %v1728, 2
    %v1807 = vrot.slane %v1797, 2
    %v1808 = vrot.slane %v1799, 2
    %v1813 = vadd.f32 %v1652, %v1805
    %v1814 = vadd.f32 %v1653, %v1806
    %v1815 = vadd.f32 %v1654, %v1807
    %v1816 = vadd.f32 %v1655, %v1808
    %v1817 = vxor.u32 %v1813, 2147483648
    %v1818 = vmul.f32 %v1817, 1.442695
    %v1819 = vpow.pop %v1818
    %v1820 = vadd.f32 %v1819, 1.0
    %v1821 = vrcp.pop %v1820
    %v1822 = vmul.f32 1.0, %v1821
    %v1823 = vxor.u32 %v1814, 2147483648
    %v1824 = vmul.f32 %v1823, 1.442695
    %v1825 = vpow.pop %v1824
    %v1826 = vadd.f32 %v1825, 1.0
    %v1827 = vrcp.pop %v1826
    %v1828 = vmul.f32 1.0, %v1827
    %v1829 = vtanh.pop %v1815
    %v1830 = vxor.u32 %v1816, 2147483648
    %v1831 = vmul.f32 %v1830, 1.442695
    %v1832 = vpow.pop %v1831
    %v1833 = vadd.f32 %v1832, 1.0
    %v1834 = vrcp.pop %v1833
    %v1835 = vmul.f32 1.0, %v1834
    %v1837 = vrot.slane %v1649, 6
    %v1839 = vmul.f32 %v1828, %v1837
    %v1840 = vmul.f32 %v1822, %v1829
    %v1841 = vadd.f32 %v1839, %v1840
    %v1842 = vtanh.pop %v1841
    %v1843 = vmul.f32 %v1835, %v1842
    %v1844 = vld [vmem:[#allocation9] sm:$0xff]
    %v1845 = vld [vmem:[#allocation9 + $0x8] sm:$0xff]
    %v1846 = vld [vmem:[#allocation9 + $0x10] sm:$0xff]
    %v1847 = vld [vmem:[#allocation9 + $0x18] sm:$0xff]
    %v1848 = vld [vmem:[#allocation9 + $0x20] sm:$0xff]
    %v1849 = vld [vmem:[#allocation9 + $0x28] sm:$0xff]
    %v1850 = vld [vmem:[#allocation9 + $0x30] sm:$0xff]
    %v1851 = vld [vmem:[#allocation9 + $0x38] sm:$0xff]
    %v1852 = vld [vmem:[#allocation9 + $0x40] sm:$0xff]
    %v1853 = vld [vmem:[#allocation9 + $0x48] sm:$0xff]
    %v1854 = vld [vmem:[#allocation9 + $0x50] sm:$0xff]
    %v1855 = vld [vmem:[#allocation9 + $0x58] sm:$0xff]
    %v1856 = vld [vmem:[#allocation9 + $0x60] sm:$0xff]
    %v1857 = vld [vmem:[#allocation9 + $0x68] sm:$0xff]
    %v1858 = vld [vmem:[#allocation9 + $0x70] sm:$0xff]
    %v1859 = vld [vmem:[#allocation9 + $0x78] sm:$0xff]
    %v1860 = vld [vmem:[%s5] sm:$0x1]
    %v1862 = vlaneseq
    %v1863 = vshrl.u32 %v1862, 7
    %v1864 = vsub.s32 0, %v1863
    %v1865 = vrot.slane %v1860, %v1864
    %v1868 = vrot.slane %v1843, 6
    %1870 = vmatprep.subr.mxu0 0.0
    %1871 = vmatpush1.msra.mxu0 %v1844
    %1872 = vmatprep.subr.mxu0 0.0
    %1873 = vmatpush1.msra.mxu0 %v1845
    %1874 = vmatprep.subr.mxu0 0.0
    %1875 = vmatpush1.msra.mxu0 %v1846
    %1876 = vmatprep.subr.mxu0 0.0
    %1877 = vmatpush1.msra.mxu0 %v1847
    %1878 = vmatprep.subr.mxu0 0.0
    %1879 = vmatpush1.msra.mxu0 %v1848
    %1880 = vmatprep.subr.mxu0 0.0
    %1881 = vmatpush1.msra.mxu0 %v1849
    %1882 = vmatprep.subr.mxu0 0.0
    %1883 = vmatpush1.msra.mxu0 %v1850
    %1884 = vmatprep.subr.mxu0 0.0
    %1885 = vmatpush1.msra.mxu0 %v1851
    %1886 = vmatprep.subr.mxu0 0.0
    %1887 = vmatpush1.msra.mxu0 %v1852
    %1888 = vmatprep.subr.mxu0 0.0
    %1889 = vmatpush1.msra.mxu0 %v1853
    %1890 = vmatprep.subr.mxu0 0.0
    %1891 = vmatpush1.msra.mxu0 %v1854
    %1892 = vmatprep.subr.mxu0 0.0
    %1893 = vmatpush1.msra.mxu0 %v1855
    %1894 = vmatprep.subr.mxu0 0.0
    %1895 = vmatpush1.msra.mxu0 %v1856
    %1896 = vmatprep.subr.mxu0 0.0
    %1897 = vmatpush1.msra.mxu0 %v1857
    %1898 = vmatprep.subr.mxu0 0.0
    %1899 = vmatpush1.msra.mxu0 %v1858
    %1900 = vmatprep.subr.mxu0 0.0
    %1901 = vmatpush1.msra.mxu0 %v1859
    %1902 = vmatprep.subr.mxu0 0.0
    %1903 = vmatpush1.msra.mxu0 0.0
    %1904 = vmatprep.subr.mxu0 0.0
    %1905 = vmatpush1.msra.mxu0 0.0
    %1906 = vmatprep.subr.mxu0 0.0
    %1907 = vmatpush1.msra.mxu0 0.0
    %1908 = vmatprep.subr.mxu0 0.0
    %1909 = vmatpush1.msra.mxu0 0.0
    %1910 = vmatprep.subr.mxu0 0.0
    %1911 = vmatpush1.msra.mxu0 0.0
    %1912 = vmatprep.subr.mxu0 0.0
    %1913 = vmatpush1.msra.mxu0 0.0
    %1914 = vmatprep.subr.mxu0 0.0
    %1915 = vmatpush1.msra.mxu0 0.0
    %1916 = vmatprep.subr.mxu0 0.0
    %1917 = vmatpush1.msra.mxu0 0.0
    %1918 = vmatprep.subr.mxu0 0.0
    %1919 = vmatpush1.msra.mxu0 0.0
    %1920 = vmatprep.subr.mxu0 0.0
    %1921 = vmatpush1.msra.mxu0 0.0
    %1922 = vmatprep.subr.mxu0 0.0
    %1923 = vmatpush1.msra.mxu0 0.0
    %1924 = vmatprep.subr.mxu0 0.0
    %1925 = vmatpush1.msra.mxu0 0.0
    %1926 = vmatprep.subr.mxu0 0.0
    %1927 = vmatpush1.msra.mxu0 0.0
    %1928 = vmatprep.subr.mxu0 0.0
    %1929 = vmatpush1.msra.mxu0 0.0
    %1930 = vmatprep.subr.mxu0 0.0
    %1931 = vmatpush1.msra.mxu0 0.0
    %1932 = vmatprep.subr.mxu0 0.0
    %1933 = vmatpush1.msra.mxu0 0.0
    %1934 = vmatprep.mubr.f32.mxu0 0.0
    %1935 = vmatmul.mubr.f32.gmra.mrb[0].mxu0 %v1868
    %v1936 = vpop.f32.mrb[0].mxu0
    %v1937 = vadd.f32 %v1865, %v1936
    %v1938 = vpop.f32.mrb[0].mxu0
    %1939 = vdwg.mxu0
    %1940 = vst [vmem:[#allocation11] sm:$0x3] %v1937
    // Predicated region
    $region42: #{tpu_custom_call.1} parent=1 // pred_check
      _
    $region43: #{tpu_custom_call.1} parent=1 // pred_check_branch
      %1942 = sbr.rel (0) target = $region45
    $region44: #{tpu_custom_call.1} parent=1 // pred_region
      %s1944 = ssub.s32 32, 32
      %1945 = vsyncadd [#allocation5], %s1944
      %s1947 = sshll.u32 [#allocation11], 4
      %s1948 = int_to_ptr.vmem [resolvable:$true] %s1947
      %1950 = dma.vmem_to_hbm [thread:$0]  %s1948, 32, %s6, [#allocation5]
    $region45: #{tpu_custom_call.1} parent=1 // pred_fallthru
      _
    // Predicated region
    $region46: #{tpu_custom_call.1} parent=1 // pred_check
      _
    $region47: #{tpu_custom_call.1} parent=1 // pred_check_branch
      %1952 = sbr.rel (0) target = $region49
    $region48: #{tpu_custom_call.1} parent=1 // pred_region
      %1953 = dma.done [#allocation5], 32
    $region49: #{tpu_custom_call.1} parent=1 // pred_fallthru
      _
    %1954 = vsyncpa [#allocation4], 1
    %1955 = vsyncpa [#allocation7], 1
    %1956 = vsyncpa [#allocation10], 1
    %1957 = vsyncpa [#allocation5], 1

</llo_original>
